<compile_context>
chip_gen: v7x
topology: tpu7x:2x2x1
jax: 0.10.0
libtpu: 0.0.40
codegen_flags: <defaults>
</compile_context>

<pallas_src>
import math

import jax
import jax.numpy as jnp
from jax import lax
from jax.experimental import pallas as pl
from jax.experimental.pallas import tpu as pltpu

# ----- small, forward-consistent shapes -----
VOCAB = 100
MAX_SEQ = 16
B, S = 2, 8
N = B * S                      # batch*seq collapsed into one slab
D_MODEL = 32
D_FF = 64
NUM_HEADS = 4
D_K = D_MODEL // NUM_HEADS
HN = NUM_HEADS * N             # head-folded row count (64)
NUM_LAYERS = 2
EPS = 1e-5                     # torch.nn.LayerNorm default

VEC_ROWS = 8                   # packed per-layer vector table
VEC_LANES = 128


# ---------------------------------------------------------------------------
# in-kernel helpers
# ---------------------------------------------------------------------------
def _layernorm(x, gamma, beta):
    mu = jnp.mean(x, axis=-1, keepdims=True)
    var = jnp.mean((x - mu) ** 2, axis=-1, keepdims=True)
    return (x - mu) * lax.rsqrt(var + EPS) * gamma + beta


def _gelu_exact(x):
    # F.gelu default = exact erf gelu
    return 0.5 * x * (1.0 + lax.erf(x * 0.7071067811865476))


# ---------------------------------------------------------------------------
# fused kernel: embed(+pos) + NUM_LAYERS encoder layers + final LayerNorm
# single invocation (no grid); activation carried in vregs across the
# statically unrolled layer loop.
# ---------------------------------------------------------------------------
def fused_encoder_kernel(emb_ref, pos_ref, bias_ref,
                         wqkv_ref, wo_ref, w1_ref, w2_ref,
                         vec_ref, lnf_ref, o_ref):
    # embedding (sqrt(D) scale already folded into the table) + positional table
    x = emb_ref[...] + pos_ref[...]                   # (N, D) f32
    bias = bias_ref[...]                              # (H*N, H*N) additive mask
    scale = 1.0 / math.sqrt(D_K)

    # NUM_LAYERS == 2 -> statically unrolled layer loop, static weight indexing.
    for l in range(NUM_LAYERS):
        # ---- unpack this layer's packed small vectors: (8, 128) ----
        vec = vec_ref[l]
        ln1_g = vec[0:1, :D_MODEL]
        ln1_b = vec[1:2, :D_MODEL]
        ln2_g = vec[2:3, :D_MODEL]
        ln2_b = vec[3:4, :D_MODEL]
        b_qkv = vec[4:5, :3 * D_MODEL]
        b_o = vec[5:6, :D_MODEL]
        b_1 = vec[6:7, :D_FF]
        b_2 = vec[7:8, :D_MODEL]

        # ---------- attention block: ax = W_O(softmax(QK^T/sqrt(dk)+bias) V) --
        nx = _layernorm(x, ln1_g, ln1_b)
        qkv = jnp.dot(nx.astype(jnp.bfloat16), wqkv_ref[l],
                      preferred_element_type=jnp.float32) + b_qkv   # (N, 3D) f32

        # fold heads into the sublane axis: (N, D) -> (H*N, D_K)
        def fold(t):
            return jnp.concatenate(
                [t[:, h * D_K:(h + 1) * D_K] for h in range(NUM_HEADS)], axis=0)

        qf = fold(qkv[:, :D_MODEL])                   # (HN, D_K)
        kf = fold(qkv[:, D_MODEL:2 * D_MODEL])        # (HN, D_K)
        vf = fold(qkv[:, 2 * D_MODEL:])               # (HN, D_K)

        # one score matmul + one softmax + one PV matmul for ALL heads
        s = lax.dot_general(qf, kf, (((1,), (1,)), ((), ())),
                            preferred_element_type=jnp.float32) * scale + bias
        s = s - jnp.max(s, axis=-1, keepdims=True)
        e = jnp.exp(s)
        p = e * pl.reciprocal(jnp.sum(e, axis=-1, keepdims=True), approx=True)
        zf = jnp.dot(p, vf, preferred_element_type=jnp.float32)     # (HN, D_K)

        # scatter heads back to lanes -> (N, D), then ONE output projection
        z = jnp.concatenate(
            [zf[h * N:(h + 1) * N, :] for h in range(NUM_HEADS)], axis=1)
        ax = jnp.dot(z.astype(jnp.bfloat16), wo_ref[l],
                     preferred_element_type=jnp.float32) + b_o

        y = x + ax                                    # residual into the FFN block

        # ---------- feed-forward block: bx = W2(gelu(W1(norm(y)))) ------------
        ny = _layernorm(y, ln2_g, ln2_b)
        h1 = _gelu_exact(jnp.dot(ny.astype(jnp.bfloat16), w1_ref[l],
                                 preferred_element_type=jnp.float32) + b_1)
        bx = jnp.dot(h1.astype(jnp.bfloat16), w2_ref[l],
                     preferred_element_type=jnp.float32) + b_2

        # EncoderLayer.forward:  x + ax + bx  (== y + bx)
        x = y + bx

    # ---- EncoderStack.norm, single store of the output ----------------------
    lnf = lnf_ref[...]
    o_ref[...] = _layernorm(x, lnf[0:1, :], lnf[1:2, :]).astype(o_ref.dtype)


# ---------------------------------------------------------------------------
# pallas_call wrapper (single invocation, whole-array VMEM blocks)
# ---------------------------------------------------------------------------
def fancy_encoder_pallas(emb, pos, attn_bias, w_qkv, w_o, w_1, w_2, vecs, lnf):
    args = (emb, pos, attn_bias, w_qkv, w_o, w_1, w_2, vecs, lnf)

    # Explicit VMEM budget check so the "everything resident" layout is
    # re-derived if shapes grow (v7x has only 64 MiB VMEM per TensorCore).
    footprint = sum(a.size * a.dtype.itemsize for a in args) + N * D_MODEL * 4
    assert footprint < 16 * 1024 * 1024, (
        f"resident footprint {footprint} B too large -- retile before scaling up")

    return pl.pallas_call(
        fused_encoder_kernel,
        out_shape=jax.ShapeDtypeStruct((N, D_MODEL), jnp.float32),
        compiler_params=pltpu.CompilerParams(vmem_limit_bytes=32 << 20),
    )(*args)


# ---------------------------------------------------------------------------
# deterministic parameter / constant construction (matches __init__ shapes)
# ---------------------------------------------------------------------------
def positional_encoding(max_seq_len, d_emb):
    t = jnp.arange(max_seq_len, dtype=jnp.float32)[:, None]
    freqs = 1.0 / (10000.0 ** (jnp.arange(0, d_emb, 2, dtype=jnp.float32) / d_emb))
    pmat = jnp.zeros((max_seq_len, d_emb), jnp.float32)
    pmat = pmat.at[:, 0::2].set(jnp.sin(freqs * t))
    pmat = pmat.at[:, 1::2].set(jnp.cos(freqs * t))
    return pmat


def _pad_lanes(v, width=VEC_LANES):
    return jnp.zeros((width,), jnp.float32).at[: v.shape[0]].set(v)


def init_params(key):
    std = 0.125 / math.sqrt(D_MODEL)
    out_scale = 1.0 / math.sqrt(2 * NUM_LAYERS)   # EncoderStack._init_parameters
    k_emb, kq, kk, kv, ko, k1, k2 = jax.random.split(key, 7)

    # Embedding.forward's sqrt(d_model) scale folded into the table at init.
    params = {"emb": (std * jax.random.normal(k_emb, (VOCAB, D_MODEL), jnp.float32)
                      * math.sqrt(D_MODEL))}

    # EncoderStack deepcopies ONE template layer -> identical weights per layer.
    # torch Linear weights are (out, in); transpose to (in, out) for x @ W.
    wq = (std * jax.random.normal(kq, (D_MODEL, D_MODEL), jnp.float32)).T
    wk = (std * jax.random.normal(kk, (D_MODEL, D_MODEL), jnp.float32)).T
    wv = (std * jax.random.normal(kv, (D_MODEL, D_MODEL), jnp.float32)).T
    wo = (std * out_scale * jax.random.normal(ko, (D_MODEL, D_MODEL), jnp.float32)).T
    w1 = (std * jax.random.normal(k1, (D_FF, D_MODEL), jnp.float32)).T
    w2 = (std * out_scale * jax.random.normal(k2, (D_MODEL, D_FF), jnp.float32)).T

    w_qkv = jnp.concatenate([wq, wk, wv], axis=1)          # fused (D, 3D)

    vec = jnp.stack([
        _pad_lanes(jnp.ones((D_MODEL,), jnp.float32)),     # ln1 gamma
        _pad_lanes(jnp.zeros((D_MODEL,), jnp.float32)),    # ln1 beta
        _pad_lanes(jnp.ones((D_MODEL,), jnp.float32)),     # ln2 gamma
        _pad_lanes(jnp.zeros((D_MODEL,), jnp.float32)),    # ln2 beta
        _pad_lanes(jnp.zeros((3 * D_MODEL,), jnp.float32)),  # b_qkv
        _pad_lanes(jnp.zeros((D_MODEL,), jnp.float32)),    # b_o
        _pad_lanes(jnp.zeros((D_FF,), jnp.float32)),       # b_1
        _pad_lanes(jnp.zeros((D_MODEL,), jnp.float32)),    # b_2
    ])                                                     # (8, 128)

    def stack(a, dtype=None):
        s = jnp.stack([a] * NUM_LAYERS)
        return s if dtype is None else s.astype(dtype)

    params.update(
        # matmul weights stored bf16 (native MXU issue); small vectors stay f32
        w_qkv=stack(w_qkv, jnp.bfloat16), w_o=stack(wo, jnp.bfloat16),
        w_1=stack(w1, jnp.bfloat16), w_2=stack(w2, jnp.bfloat16),
        vecs=stack(vec),
        lnf=jnp.stack([jnp.ones((D_MODEL,), jnp.float32),
                       jnp.zeros((D_MODEL,), jnp.float32)]),        # (2, D)
        # positional table hoisted here (computed once), pre-tiled over batch
        pos=jnp.tile(positional_encoding(MAX_SEQ, D_MODEL)[:S], (B, 1)),  # (N, D)
    )
    return params


@jax.jit
def fancy_encoder_forward(params, tokens, src_mask):
    # Embedding gather and attention-bias construction are wrapper glue; the
    # rest of the forward runs inside the single fused pallas_call.
    # TODO(synk): nn.Dropout layers are identity here (eval-mode forward).
    emb = jnp.take(params["emb"], tokens.reshape(-1), axis=0)        # (N, D)

    # Key-position bias (matches (1-mask)*-10000), extended to the head-folded
    # (H*N, H*N) score layout: finite bias only where same-batch AND same-head,
    # -1e30 elsewhere.  Invariant: every query row keeps a finite diagonal entry
    # (its own position, same batch/head), so the row max is finite and the
    # -1e30 entries exp-underflow to exactly 0 (never 0/0).
    key_bias = (1.0 - src_mask.astype(jnp.float32).reshape(-1)) * -10000.0
    batch_ids = jnp.repeat(jnp.arange(B, dtype=jnp.int32), S)
    same_batch = batch_ids[:, None] == batch_ids[None, :]
    bias_nn = jnp.where(same_batch, key_bias[None, :], -1e30)       # (N, N)
    head_ids = jnp.repeat(jnp.arange(NUM_HEADS, dtype=jnp.int32), N)
    same_head = head_ids[:, None] == head_ids[None, :]
    attn_bias = jnp.where(same_head, jnp.tile(bias_nn, (NUM_HEADS, NUM_HEADS)),
                          -1e30).astype(jnp.float32)                # (HN, HN)

    out = fancy_encoder_pallas(emb, params["pos"], attn_bias,
                               params["w_qkv"], params["w_o"],
                               params["w_1"], params["w_2"],
                               params["vecs"], params["lnf"])
    return out.reshape(B, S, D_MODEL)


if __name__ == "__main__":
    key = jax.random.PRNGKey(0)
    kparam, ktok = jax.random.split(key)

    params = init_params(kparam)
    tokens = jax.random.randint(ktok, (B, S), 0, VOCAB, dtype=jnp.int32)
    src_mask = jnp.ones((B, S), jnp.float32).at[1, 6:].set(0.0)  # pad last 2 of ex. 1

    out = fancy_encoder_forward(params, tokens, src_mask)
    jax.block_until_ready(out)
    assert out.shape == (B, S, D_MODEL) and out.dtype == jnp.float32
    assert bool(jnp.all(jnp.isfinite(out)))
    print("KERNEL_OK")
</pallas_src>

<mosaic_0001>
module attributes {stable_mosaic.version = 11 : i64} {
  func.func @fused_encoder_kernel(%arg0: memref<16x32xf32, #tpu.memory_space<vmem>>, %arg1: memref<16x32xf32, #tpu.memory_space<vmem>>, %arg2: memref<64x64xf32, #tpu.memory_space<vmem>>, %arg3: memref<2x32x96xbf16, #tpu.memory_space<vmem>>, %arg4: memref<2x32x32xbf16, #tpu.memory_space<vmem>>, %arg5: memref<2x32x64xbf16, #tpu.memory_space<vmem>>, %arg6: memref<2x64x32xbf16, #tpu.memory_space<vmem>>, %arg7: memref<2x8x128xf32, #tpu.memory_space<vmem>>, %arg8: memref<2x32xf32, #tpu.memory_space<vmem>>, %arg9: memref<16x32xf32, #tpu.memory_space<vmem>>) attributes {dimension_semantics = [], scalar_prefetch = 0 : i64, scratch_operands = 0 : i64, tpu.core_type = #tpu.core_type<tc>} {
    %c0 = arith.constant 0 : index
    %c0_0 = arith.constant 0 : index
    %0 = vector.load %arg0[%c0, %c0_0] : memref<16x32xf32, #tpu.memory_space<vmem>>, vector<16x32xf32>
    %c0_1 = arith.constant 0 : index
    %c0_2 = arith.constant 0 : index
    %1 = vector.load %arg1[%c0_1, %c0_2] : memref<16x32xf32, #tpu.memory_space<vmem>>, vector<16x32xf32>
    %2 = arith.addf %0, %1 : vector<16x32xf32>
    %c0_3 = arith.constant 0 : index
    %c0_4 = arith.constant 0 : index
    %3 = vector.load %arg2[%c0_3, %c0_4] : memref<64x64xf32, #tpu.memory_space<vmem>>, vector<64x64xf32>
    %c0_5 = arith.constant 0 : index
    %c0_6 = arith.constant 0 : index
    %c0_7 = arith.constant 0 : index
    %4 = vector.load %arg7[%c0_5, %c0_6, %c0_7] : memref<2x8x128xf32, #tpu.memory_space<vmem>>, vector<1x8x128xf32>
    %5 = vector.shape_cast %4 : vector<1x8x128xf32> to vector<8x128xf32>
    %6 = vector.extract_strided_slice %5 {offsets = [0, 0], sizes = [1, 32], strides = [1, 1]} : vector<8x128xf32> to vector<1x32xf32>
    %7 = vector.extract_strided_slice %5 {offsets = [1, 0], sizes = [1, 32], strides = [1, 1]} : vector<8x128xf32> to vector<1x32xf32>
    %8 = vector.extract_strided_slice %5 {offsets = [2, 0], sizes = [1, 32], strides = [1, 1]} : vector<8x128xf32> to vector<1x32xf32>
    %9 = vector.extract_strided_slice %5 {offsets = [3, 0], sizes = [1, 32], strides = [1, 1]} : vector<8x128xf32> to vector<1x32xf32>
    %10 = vector.extract_strided_slice %5 {offsets = [4, 0], sizes = [1, 96], strides = [1, 1]} : vector<8x128xf32> to vector<1x96xf32>
    %11 = vector.extract_strided_slice %5 {offsets = [5, 0], sizes = [1, 32], strides = [1, 1]} : vector<8x128xf32> to vector<1x32xf32>
    %12 = vector.extract_strided_slice %5 {offsets = [6, 0], sizes = [1, 64], strides = [1, 1]} : vector<8x128xf32> to vector<1x64xf32>
    %13 = vector.extract_strided_slice %5 {offsets = [7, 0], sizes = [1, 32], strides = [1, 1]} : vector<8x128xf32> to vector<1x32xf32>
    %cst = arith.constant dense<0.000000e+00> : vector<16xf32>
    %14 = vector.multi_reduction <add>, %2, %cst [1] : vector<16x32xf32> to vector<16xf32>
    %15 = vector.shape_cast %14 : vector<16xf32> to vector<16x1xf32>
    %cst_8 = arith.constant 3.200000e+01 : f32
    %16 = vector.broadcast %cst_8 : f32 to vector<16x1xf32>
    %17 = arith.divf %15, %16 : vector<16x1xf32>
    %18 = vector.broadcast %17 : vector<16x1xf32> to vector<16x32xf32>
    %19 = arith.subf %2, %18 : vector<16x32xf32>
    %20 = arith.mulf %19, %19 : vector<16x32xf32>
    %cst_9 = arith.constant dense<0.000000e+00> : vector<16xf32>
    %21 = vector.multi_reduction <add>, %20, %cst_9 [1] : vector<16x32xf32> to vector<16xf32>
    %22 = vector.shape_cast %21 : vector<16xf32> to vector<16x1xf32>
    %cst_10 = arith.constant 3.200000e+01 : f32
    %23 = vector.broadcast %cst_10 : f32 to vector<16x1xf32>
    %24 = arith.divf %22, %23 : vector<16x1xf32>
    %25 = vector.broadcast %17 : vector<16x1xf32> to vector<16x32xf32>
    %26 = arith.subf %2, %25 : vector<16x32xf32>
    %cst_11 = arith.constant 9.99999974E-6 : f32
    %27 = vector.broadcast %cst_11 : f32 to vector<16x1xf32>
    %28 = arith.addf %24, %27 : vector<16x1xf32>
    %29 = math.rsqrt %28 : vector<16x1xf32>
    %30 = vector.broadcast %29 : vector<16x1xf32> to vector<16x32xf32>
    %31 = arith.mulf %26, %30 : vector<16x32xf32>
    %32 = vector.broadcast %6 : vector<1x32xf32> to vector<16x32xf32>
    %33 = arith.mulf %31, %32 : vector<16x32xf32>
    %34 = vector.broadcast %7 : vector<1x32xf32> to vector<16x32xf32>
    %35 = arith.addf %33, %34 : vector<16x32xf32>
    %36 = arith.truncf %35 : vector<16x32xf32> to vector<16x32xbf16>
    %c0_12 = arith.constant 0 : index
    %c0_13 = arith.constant 0 : index
    %c0_14 = arith.constant 0 : index
    %37 = vector.load %arg3[%c0_12, %c0_13, %c0_14] : memref<2x32x96xbf16, #tpu.memory_space<vmem>>, vector<1x32x96xbf16>
    %38 = vector.shape_cast %37 : vector<1x32x96xbf16> to vector<32x96xbf16>
    %cst_15 = arith.constant dense<0.000000e+00> : vector<16x96xf32>
    %39 = tpu.matmul %36, %38, %cst_15 {dimension_numbers = #tpu.dot_dimension_numbers<[1], [0], [0], [1], [0, 0, 1, 1], [], []>} : vector<16x32xbf16>, vector<32x96xbf16>, vector<16x96xf32> -> vector<16x96xf32>
    %40 = vector.broadcast %10 : vector<1x96xf32> to vector<16x96xf32>
    %41 = arith.addf %39, %40 : vector<16x96xf32>
    %42 = vector.extract_strided_slice %41 {offsets = [0, 0], sizes = [16, 32], strides = [1, 1]} : vector<16x96xf32> to vector<16x32xf32>
    %43 = vector.extract_strided_slice %42 {offsets = [0, 0], sizes = [16, 8], strides = [1, 1]} : vector<16x32xf32> to vector<16x8xf32>
    %44 = vector.extract_strided_slice %42 {offsets = [0, 8], sizes = [16, 8], strides = [1, 1]} : vector<16x32xf32> to vector<16x8xf32>
    %45 = vector.extract_strided_slice %42 {offsets = [0, 16], sizes = [16, 8], strides = [1, 1]} : vector<16x32xf32> to vector<16x8xf32>
    %46 = vector.extract_strided_slice %42 {offsets = [0, 24], sizes = [16, 8], strides = [1, 1]} : vector<16x32xf32> to vector<16x8xf32>
    %47 = tpu.concatenate %43, %44, %45, %46 in 0 : vector<16x8xf32>, vector<16x8xf32>, vector<16x8xf32>, vector<16x8xf32> -> vector<64x8xf32>
    %48 = vector.extract_strided_slice %41 {offsets = [0, 32], sizes = [16, 32], strides = [1, 1]} : vector<16x96xf32> to vector<16x32xf32>
    %49 = vector.extract_strided_slice %48 {offsets = [0, 0], sizes = [16, 8], strides = [1, 1]} : vector<16x32xf32> to vector<16x8xf32>
    %50 = vector.extract_strided_slice %48 {offsets = [0, 8], sizes = [16, 8], strides = [1, 1]} : vector<16x32xf32> to vector<16x8xf32>
    %51 = vector.extract_strided_slice %48 {offsets = [0, 16], sizes = [16, 8], strides = [1, 1]} : vector<16x32xf32> to vector<16x8xf32>
    %52 = vector.extract_strided_slice %48 {offsets = [0, 24], sizes = [16, 8], strides = [1, 1]} : vector<16x32xf32> to vector<16x8xf32>
    %53 = tpu.concatenate %49, %50, %51, %52 in 0 : vector<16x8xf32>, vector<16x8xf32>, vector<16x8xf32>, vector<16x8xf32> -> vector<64x8xf32>
    %54 = vector.extract_strided_slice %41 {offsets = [0, 64], sizes = [16, 32], strides = [1, 1]} : vector<16x96xf32> to vector<16x32xf32>
    %55 = vector.extract_strided_slice %54 {offsets = [0, 0], sizes = [16, 8], strides = [1, 1]} : vector<16x32xf32> to vector<16x8xf32>
    %56 = vector.extract_strided_slice %54 {offsets = [0, 8], sizes = [16, 8], strides = [1, 1]} : vector<16x32xf32> to vector<16x8xf32>
    %57 = vector.extract_strided_slice %54 {offsets = [0, 16], sizes = [16, 8], strides = [1, 1]} : vector<16x32xf32> to vector<16x8xf32>
    %58 = vector.extract_strided_slice %54 {offsets = [0, 24], sizes = [16, 8], strides = [1, 1]} : vector<16x32xf32> to vector<16x8xf32>
    %59 = tpu.concatenate %55, %56, %57, %58 in 0 : vector<16x8xf32>, vector<16x8xf32>, vector<16x8xf32>, vector<16x8xf32> -> vector<64x8xf32>
    %cst_16 = arith.constant dense<0.000000e+00> : vector<64x64xf32>
    %60 = tpu.matmul %47, %53, %cst_16 {dimension_numbers = #tpu.dot_dimension_numbers<[1], [1], [0], [0], [0, 0, 1, 0], [], []>} : vector<64x8xf32>, vector<64x8xf32>, vector<64x64xf32> -> vector<64x64xf32>
    %cst_17 = arith.constant 0.353553385 : f32
    %61 = vector.broadcast %cst_17 : f32 to vector<64x64xf32>
    %62 = arith.mulf %60, %61 : vector<64x64xf32>
    %63 = arith.addf %62, %3 : vector<64x64xf32>
    %cst_18 = arith.constant dense<0xFF800000> : vector<64xf32>
    %64 = vector.multi_reduction <maximumf>, %63, %cst_18 [1] : vector<64x64xf32> to vector<64xf32>
    %65 = vector.shape_cast %64 : vector<64xf32> to vector<64x1xf32>
    %66 = vector.broadcast %65 : vector<64x1xf32> to vector<64x64xf32>
    %67 = arith.subf %63, %66 : vector<64x64xf32>
    %68 = math.exp %67 : vector<64x64xf32>
    %cst_19 = arith.constant dense<0.000000e+00> : vector<64xf32>
    %69 = vector.multi_reduction <add>, %68, %cst_19 [1] : vector<64x64xf32> to vector<64xf32>
    %70 = vector.shape_cast %69 : vector<64xf32> to vector<64x1xf32>
    %71 = tpu.reciprocal %70 {approx = true} : vector<64x1xf32> -> vector<64x1xf32>
    %72 = vector.broadcast %71 : vector<64x1xf32> to vector<64x64xf32>
    %73 = arith.mulf %68, %72 : vector<64x64xf32>
    %cst_20 = arith.constant dense<0.000000e+00> : vector<64x8xf32>
    %74 = tpu.matmul %73, %59, %cst_20 {dimension_numbers = #tpu.dot_dimension_numbers<[1], [0], [0], [1], [0, 0, 1, 1], [], []>} : vector<64x64xf32>, vector<64x8xf32>, vector<64x8xf32> -> vector<64x8xf32>
    %75 = vector.extract_strided_slice %74 {offsets = [0, 0], sizes = [16, 8], strides = [1, 1]} : vector<64x8xf32> to vector<16x8xf32>
    %76 = vector.extract_strided_slice %74 {offsets = [16, 0], sizes = [16, 8], strides = [1, 1]} : vector<64x8xf32> to vector<16x8xf32>
    %77 = vector.extract_strided_slice %74 {offsets = [32, 0], sizes = [16, 8], strides = [1, 1]} : vector<64x8xf32> to vector<16x8xf32>
    %78 = vector.extract_strided_slice %74 {offsets = [48, 0], sizes = [16, 8], strides = [1, 1]} : vector<64x8xf32> to vector<16x8xf32>
    %79 = tpu.concatenate %75, %76, %77, %78 in 1 : vector<16x8xf32>, vector<16x8xf32>, vector<16x8xf32>, vector<16x8xf32> -> vector<16x32xf32>
    %80 = arith.truncf %79 : vector<16x32xf32> to vector<16x32xbf16>
    %c0_21 = arith.constant 0 : index
    %c0_22 = arith.constant 0 : index
    %c0_23 = arith.constant 0 : index
    %81 = vector.load %arg4[%c0_21, %c0_22, %c0_23] : memref<2x32x32xbf16, #tpu.memory_space<vmem>>, vector<1x32x32xbf16>
    %82 = vector.shape_cast %81 : vector<1x32x32xbf16> to vector<32x32xbf16>
    %cst_24 = arith.constant dense<0.000000e+00> : vector<16x32xf32>
    %83 = tpu.matmul %80, %82, %cst_24 {dimension_numbers = #tpu.dot_dimension_numbers<[1], [0], [0], [1], [0, 0, 1, 1], [], []>} : vector<16x32xbf16>, vector<32x32xbf16>, vector<16x32xf32> -> vector<16x32xf32>
    %84 = vector.broadcast %11 : vector<1x32xf32> to vector<16x32xf32>
    %85 = arith.addf %83, %84 : vector<16x32xf32>
    %86 = arith.addf %2, %85 : vector<16x32xf32>
    %cst_25 = arith.constant dense<0.000000e+00> : vector<16xf32>
    %87 = vector.multi_reduction <add>, %86, %cst_25 [1] : vector<16x32xf32> to vector<16xf32>
    %88 = vector.shape_cast %87 : vector<16xf32> to vector<16x1xf32>
    %cst_26 = arith.constant 3.200000e+01 : f32
    %89 = vector.broadcast %cst_26 : f32 to vector<16x1xf32>
    %90 = arith.divf %88, %89 : vector<16x1xf32>
    %91 = vector.broadcast %90 : vector<16x1xf32> to vector<16x32xf32>
    %92 = arith.subf %86, %91 : vector<16x32xf32>
    %93 = arith.mulf %92, %92 : vector<16x32xf32>
    %cst_27 = arith.constant dense<0.000000e+00> : vector<16xf32>
    %94 = vector.multi_reduction <add>, %93, %cst_27 [1] : vector<16x32xf32> to vector<16xf32>
    %95 = vector.shape_cast %94 : vector<16xf32> to vector<16x1xf32>
    %cst_28 = arith.constant 3.200000e+01 : f32
    %96 = vector.broadcast %cst_28 : f32 to vector<16x1xf32>
    %97 = arith.divf %95, %96 : vector<16x1xf32>
    %98 = vector.broadcast %90 : vector<16x1xf32> to vector<16x32xf32>
    %99 = arith.subf %86, %98 : vector<16x32xf32>
    %cst_29 = arith.constant 9.99999974E-6 : f32
    %100 = vector.broadcast %cst_29 : f32 to vector<16x1xf32>
    %101 = arith.addf %97, %100 : vector<16x1xf32>
    %102 = math.rsqrt %101 : vector<16x1xf32>
    %103 = vector.broadcast %102 : vector<16x1xf32> to vector<16x32xf32>
    %104 = arith.mulf %99, %103 : vector<16x32xf32>
    %105 = vector.broadcast %8 : vector<1x32xf32> to vector<16x32xf32>
    %106 = arith.mulf %104, %105 : vector<16x32xf32>
    %107 = vector.broadcast %9 : vector<1x32xf32> to vector<16x32xf32>
    %108 = arith.addf %106, %107 : vector<16x32xf32>
    %109 = arith.truncf %108 : vector<16x32xf32> to vector<16x32xbf16>
    %c0_30 = arith.constant 0 : index
    %c0_31 = arith.constant 0 : index
    %c0_32 = arith.constant 0 : index
    %110 = vector.load %arg5[%c0_30, %c0_31, %c0_32] : memref<2x32x64xbf16, #tpu.memory_space<vmem>>, vector<1x32x64xbf16>
    %111 = vector.shape_cast %110 : vector<1x32x64xbf16> to vector<32x64xbf16>
    %cst_33 = arith.constant dense<0.000000e+00> : vector<16x64xf32>
    %112 = tpu.matmul %109, %111, %cst_33 {dimension_numbers = #tpu.dot_dimension_numbers<[1], [0], [0], [1], [0, 0, 1, 1], [], []>} : vector<16x32xbf16>, vector<32x64xbf16>, vector<16x64xf32> -> vector<16x64xf32>
    %113 = vector.broadcast %12 : vector<1x64xf32> to vector<16x64xf32>
    %114 = arith.addf %112, %113 : vector<16x64xf32>
    %cst_34 = arith.constant 5.000000e-01 : f32
    %115 = vector.broadcast %cst_34 : f32 to vector<16x64xf32>
    %116 = arith.mulf %115, %114 : vector<16x64xf32>
    %cst_35 = arith.constant 0.707106769 : f32
    %117 = vector.broadcast %cst_35 : f32 to vector<16x64xf32>
    %118 = arith.mulf %114, %117 : vector<16x64xf32>
    %119 = math.erf %118 : vector<16x64xf32>
    %cst_36 = arith.constant 1.000000e+00 : f32
    %120 = vector.broadcast %cst_36 : f32 to vector<16x64xf32>
    %121 = arith.addf %120, %119 : vector<16x64xf32>
    %122 = arith.mulf %116, %121 : vector<16x64xf32>
    %123 = arith.truncf %122 : vector<16x64xf32> to vector<16x64xbf16>
    %c0_37 = arith.constant 0 : index
    %c0_38 = arith.constant 0 : index
    %c0_39 = arith.constant 0 : index
    %124 = vector.load %arg6[%c0_37, %c0_38, %c0_39] : memref<2x64x32xbf16, #tpu.memory_space<vmem>>, vector<1x64x32xbf16>
    %125 = vector.shape_cast %124 : vector<1x64x32xbf16> to vector<64x32xbf16>
    %cst_40 = arith.constant dense<0.000000e+00> : vector<16x32xf32>
    %126 = tpu.matmul %123, %125, %cst_40 {dimension_numbers = #tpu.dot_dimension_numbers<[1], [0], [0], [1], [0, 0, 1, 1], [], []>} : vector<16x64xbf16>, vector<64x32xbf16>, vector<16x32xf32> -> vector<16x32xf32>
    %127 = vector.broadcast %13 : vector<1x32xf32> to vector<16x32xf32>
    %128 = arith.addf %126, %127 : vector<16x32xf32>
    %129 = arith.addf %86, %128 : vector<16x32xf32>
    %c1 = arith.constant 1 : index
    %c0_41 = arith.constant 0 : index
    %c0_42 = arith.constant 0 : index
    %130 = vector.load %arg7[%c1, %c0_41, %c0_42] : memref<2x8x128xf32, #tpu.memory_space<vmem>>, vector<1x8x128xf32>
    %131 = vector.shape_cast %130 : vector<1x8x128xf32> to vector<8x128xf32>
    %132 = vector.extract_strided_slice %131 {offsets = [0, 0], sizes = [1, 32], strides = [1, 1]} : vector<8x128xf32> to vector<1x32xf32>
    %133 = vector.extract_strided_slice %131 {offsets = [1, 0], sizes = [1, 32], strides = [1, 1]} : vector<8x128xf32> to vector<1x32xf32>
    %134 = vector.extract_strided_slice %131 {offsets = [2, 0], sizes = [1, 32], strides = [1, 1]} : vector<8x128xf32> to vector<1x32xf32>
    %135 = vector.extract_strided_slice %131 {offsets = [3, 0], sizes = [1, 32], strides = [1, 1]} : vector<8x128xf32> to vector<1x32xf32>
    %136 = vector.extract_strided_slice %131 {offsets = [4, 0], sizes = [1, 96], strides = [1, 1]} : vector<8x128xf32> to vector<1x96xf32>
    %137 = vector.extract_strided_slice %131 {offsets = [5, 0], sizes = [1, 32], strides = [1, 1]} : vector<8x128xf32> to vector<1x32xf32>
    %138 = vector.extract_strided_slice %131 {offsets = [6, 0], sizes = [1, 64], strides = [1, 1]} : vector<8x128xf32> to vector<1x64xf32>
    %139 = vector.extract_strided_slice %131 {offsets = [7, 0], sizes = [1, 32], strides = [1, 1]} : vector<8x128xf32> to vector<1x32xf32>
    %cst_43 = arith.constant dense<0.000000e+00> : vector<16xf32>
    %140 = vector.multi_reduction <add>, %129, %cst_43 [1] : vector<16x32xf32> to vector<16xf32>
    %141 = vector.shape_cast %140 : vector<16xf32> to vector<16x1xf32>
    %cst_44 = arith.constant 3.200000e+01 : f32
    %142 = vector.broadcast %cst_44 : f32 to vector<16x1xf32>
    %143 = arith.divf %141, %142 : vector<16x1xf32>
    %144 = vector.broadcast %143 : vector<16x1xf32> to vector<16x32xf32>
    %145 = arith.subf %129, %144 : vector<16x32xf32>
    %146 = arith.mulf %145, %145 : vector<16x32xf32>
    %cst_45 = arith.constant dense<0.000000e+00> : vector<16xf32>
    %147 = vector.multi_reduction <add>, %146, %cst_45 [1] : vector<16x32xf32> to vector<16xf32>
    %148 = vector.shape_cast %147 : vector<16xf32> to vector<16x1xf32>
    %cst_46 = arith.constant 3.200000e+01 : f32
    %149 = vector.broadcast %cst_46 : f32 to vector<16x1xf32>
    %150 = arith.divf %148, %149 : vector<16x1xf32>
    %151 = vector.broadcast %143 : vector<16x1xf32> to vector<16x32xf32>
    %152 = arith.subf %129, %151 : vector<16x32xf32>
    %cst_47 = arith.constant 9.99999974E-6 : f32
    %153 = vector.broadcast %cst_47 : f32 to vector<16x1xf32>
    %154 = arith.addf %150, %153 : vector<16x1xf32>
    %155 = math.rsqrt %154 : vector<16x1xf32>
    %156 = vector.broadcast %155 : vector<16x1xf32> to vector<16x32xf32>
    %157 = arith.mulf %152, %156 : vector<16x32xf32>
    %158 = vector.broadcast %132 : vector<1x32xf32> to vector<16x32xf32>
    %159 = arith.mulf %157, %158 : vector<16x32xf32>
    %160 = vector.broadcast %133 : vector<1x32xf32> to vector<16x32xf32>
    %161 = arith.addf %159, %160 : vector<16x32xf32>
    %162 = arith.truncf %161 : vector<16x32xf32> to vector<16x32xbf16>
    %c1_48 = arith.constant 1 : index
    %c0_49 = arith.constant 0 : index
    %c0_50 = arith.constant 0 : index
    %163 = vector.load %arg3[%c1_48, %c0_49, %c0_50] : memref<2x32x96xbf16, #tpu.memory_space<vmem>>, vector<1x32x96xbf16>
    %164 = vector.shape_cast %163 : vector<1x32x96xbf16> to vector<32x96xbf16>
    %cst_51 = arith.constant dense<0.000000e+00> : vector<16x96xf32>
    %165 = tpu.matmul %162, %164, %cst_51 {dimension_numbers = #tpu.dot_dimension_numbers<[1], [0], [0], [1], [0, 0, 1, 1], [], []>} : vector<16x32xbf16>, vector<32x96xbf16>, vector<16x96xf32> -> vector<16x96xf32>
    %166 = vector.broadcast %136 : vector<1x96xf32> to vector<16x96xf32>
    %167 = arith.addf %165, %166 : vector<16x96xf32>
    %168 = vector.extract_strided_slice %167 {offsets = [0, 0], sizes = [16, 32], strides = [1, 1]} : vector<16x96xf32> to vector<16x32xf32>
    %169 = vector.extract_strided_slice %168 {offsets = [0, 0], sizes = [16, 8], strides = [1, 1]} : vector<16x32xf32> to vector<16x8xf32>
    %170 = vector.extract_strided_slice %168 {offsets = [0, 8], sizes = [16, 8], strides = [1, 1]} : vector<16x32xf32> to vector<16x8xf32>
    %171 = vector.extract_strided_slice %168 {offsets = [0, 16], sizes = [16, 8], strides = [1, 1]} : vector<16x32xf32> to vector<16x8xf32>
    %172 = vector.extract_strided_slice %168 {offsets = [0, 24], sizes = [16, 8], strides = [1, 1]} : vector<16x32xf32> to vector<16x8xf32>
    %173 = tpu.concatenate %169, %170, %171, %172 in 0 : vector<16x8xf32>, vector<16x8xf32>, vector<16x8xf32>, vector<16x8xf32> -> vector<64x8xf32>
    %174 = vector.extract_strided_slice %167 {offsets = [0, 32], sizes = [16, 32], strides = [1, 1]} : vector<16x96xf32> to vector<16x32xf32>
    %175 = vector.extract_strided_slice %174 {offsets = [0, 0], sizes = [16, 8], strides = [1, 1]} : vector<16x32xf32> to vector<16x8xf32>
    %176 = vector.extract_strided_slice %174 {offsets = [0, 8], sizes = [16, 8], strides = [1, 1]} : vector<16x32xf32> to vector<16x8xf32>
    %177 = vector.extract_strided_slice %174 {offsets = [0, 16], sizes = [16, 8], strides = [1, 1]} : vector<16x32xf32> to vector<16x8xf32>
    %178 = vector.extract_strided_slice %174 {offsets = [0, 24], sizes = [16, 8], strides = [1, 1]} : vector<16x32xf32> to vector<16x8xf32>
    %179 = tpu.concatenate %175, %176, %177, %178 in 0 : vector<16x8xf32>, vector<16x8xf32>, vector<16x8xf32>, vector<16x8xf32> -> vector<64x8xf32>
    %180 = vector.extract_strided_slice %167 {offsets = [0, 64], sizes = [16, 32], strides = [1, 1]} : vector<16x96xf32> to vector<16x32xf32>
    %181 = vector.extract_strided_slice %180 {offsets = [0, 0], sizes = [16, 8], strides = [1, 1]} : vector<16x32xf32> to vector<16x8xf32>
    %182 = vector.extract_strided_slice %180 {offsets = [0, 8], sizes = [16, 8], strides = [1, 1]} : vector<16x32xf32> to vector<16x8xf32>
    %183 = vector.extract_strided_slice %180 {offsets = [0, 16], sizes = [16, 8], strides = [1, 1]} : vector<16x32xf32> to vector<16x8xf32>
    %184 = vector.extract_strided_slice %180 {offsets = [0, 24], sizes = [16, 8], strides = [1, 1]} : vector<16x32xf32> to vector<16x8xf32>
    %185 = tpu.concatenate %181, %182, %183, %184 in 0 : vector<16x8xf32>, vector<16x8xf32>, vector<16x8xf32>, vector<16x8xf32> -> vector<64x8xf32>
    %cst_52 = arith.constant dense<0.000000e+00> : vector<64x64xf32>
    %186 = tpu.matmul %173, %179, %cst_52 {dimension_numbers = #tpu.dot_dimension_numbers<[1], [1], [0], [0], [0, 0, 1, 0], [], []>} : vector<64x8xf32>, vector<64x8xf32>, vector<64x64xf32> -> vector<64x64xf32>
    %cst_53 = arith.constant 0.353553385 : f32
    %187 = vector.broadcast %cst_53 : f32 to vector<64x64xf32>
    %188 = arith.mulf %186, %187 : vector<64x64xf32>
    %189 = arith.addf %188, %3 : vector<64x64xf32>
    %cst_54 = arith.constant dense<0xFF800000> : vector<64xf32>
    %190 = vector.multi_reduction <maximumf>, %189, %cst_54 [1] : vector<64x64xf32> to vector<64xf32>
    %191 = vector.shape_cast %190 : vector<64xf32> to vector<64x1xf32>
    %192 = vector.broadcast %191 : vector<64x1xf32> to vector<64x64xf32>
    %193 = arith.subf %189, %192 : vector<64x64xf32>
    %194 = math.exp %193 : vector<64x64xf32>
    %cst_55 = arith.constant dense<0.000000e+00> : vector<64xf32>
    %195 = vector.multi_reduction <add>, %194, %cst_55 [1] : vector<64x64xf32> to vector<64xf32>
    %196 = vector.shape_cast %195 : vector<64xf32> to vector<64x1xf32>
    %197 = tpu.reciprocal %196 {approx = true} : vector<64x1xf32> -> vector<64x1xf32>
    %198 = vector.broadcast %197 : vector<64x1xf32> to vector<64x64xf32>
    %199 = arith.mulf %194, %198 : vector<64x64xf32>
    %cst_56 = arith.constant dense<0.000000e+00> : vector<64x8xf32>
    %200 = tpu.matmul %199, %185, %cst_56 {dimension_numbers = #tpu.dot_dimension_numbers<[1], [0], [0], [1], [0, 0, 1, 1], [], []>} : vector<64x64xf32>, vector<64x8xf32>, vector<64x8xf32> -> vector<64x8xf32>
    %201 = vector.extract_strided_slice %200 {offsets = [0, 0], sizes = [16, 8], strides = [1, 1]} : vector<64x8xf32> to vector<16x8xf32>
    %202 = vector.extract_strided_slice %200 {offsets = [16, 0], sizes = [16, 8], strides = [1, 1]} : vector<64x8xf32> to vector<16x8xf32>
    %203 = vector.extract_strided_slice %200 {offsets = [32, 0], sizes = [16, 8], strides = [1, 1]} : vector<64x8xf32> to vector<16x8xf32>
    %204 = vector.extract_strided_slice %200 {offsets = [48, 0], sizes = [16, 8], strides = [1, 1]} : vector<64x8xf32> to vector<16x8xf32>
    %205 = tpu.concatenate %201, %202, %203, %204 in 1 : vector<16x8xf32>, vector<16x8xf32>, vector<16x8xf32>, vector<16x8xf32> -> vector<16x32xf32>
    %206 = arith.truncf %205 : vector<16x32xf32> to vector<16x32xbf16>
    %c1_57 = arith.constant 1 : index
    %c0_58 = arith.constant 0 : index
    %c0_59 = arith.constant 0 : index
    %207 = vector.load %arg4[%c1_57, %c0_58, %c0_59] : memref<2x32x32xbf16, #tpu.memory_space<vmem>>, vector<1x32x32xbf16>
    %208 = vector.shape_cast %207 : vector<1x32x32xbf16> to vector<32x32xbf16>
    %cst_60 = arith.constant dense<0.000000e+00> : vector<16x32xf32>
    %209 = tpu.matmul %206, %208, %cst_60 {dimension_numbers = #tpu.dot_dimension_numbers<[1], [0], [0], [1], [0, 0, 1, 1], [], []>} : vector<16x32xbf16>, vector<32x32xbf16>, vector<16x32xf32> -> vector<16x32xf32>
    %210 = vector.broadcast %137 : vector<1x32xf32> to vector<16x32xf32>
    %211 = arith.addf %209, %210 : vector<16x32xf32>
    %212 = arith.addf %129, %211 : vector<16x32xf32>
    %cst_61 = arith.constant dense<0.000000e+00> : vector<16xf32>
    %213 = vector.multi_reduction <add>, %212, %cst_61 [1] : vector<16x32xf32> to vector<16xf32>
    %214 = vector.shape_cast %213 : vector<16xf32> to vector<16x1xf32>
    %cst_62 = arith.constant 3.200000e+01 : f32
    %215 = vector.broadcast %cst_62 : f32 to vector<16x1xf32>
    %216 = arith.divf %214, %215 : vector<16x1xf32>
    %217 = vector.broadcast %216 : vector<16x1xf32> to vector<16x32xf32>
    %218 = arith.subf %212, %217 : vector<16x32xf32>
    %219 = arith.mulf %218, %218 : vector<16x32xf32>
    %cst_63 = arith.constant dense<0.000000e+00> : vector<16xf32>
    %220 = vector.multi_reduction <add>, %219, %cst_63 [1] : vector<16x32xf32> to vector<16xf32>
    %221 = vector.shape_cast %220 : vector<16xf32> to vector<16x1xf32>
    %cst_64 = arith.constant 3.200000e+01 : f32
    %222 = vector.broadcast %cst_64 : f32 to vector<16x1xf32>
    %223 = arith.divf %221, %222 : vector<16x1xf32>
    %224 = vector.broadcast %216 : vector<16x1xf32> to vector<16x32xf32>
    %225 = arith.subf %212, %224 : vector<16x32xf32>
    %cst_65 = arith.constant 9.99999974E-6 : f32
    %226 = vector.broadcast %cst_65 : f32 to vector<16x1xf32>
    %227 = arith.addf %223, %226 : vector<16x1xf32>
    %228 = math.rsqrt %227 : vector<16x1xf32>
    %229 = vector.broadcast %228 : vector<16x1xf32> to vector<16x32xf32>
    %230 = arith.mulf %225, %229 : vector<16x32xf32>
    %231 = vector.broadcast %134 : vector<1x32xf32> to vector<16x32xf32>
    %232 = arith.mulf %230, %231 : vector<16x32xf32>
    %233 = vector.broadcast %135 : vector<1x32xf32> to vector<16x32xf32>
    %234 = arith.addf %232, %233 : vector<16x32xf32>
    %235 = arith.truncf %234 : vector<16x32xf32> to vector<16x32xbf16>
    %c1_66 = arith.constant 1 : index
    %c0_67 = arith.constant 0 : index
    %c0_68 = arith.constant 0 : index
    %236 = vector.load %arg5[%c1_66, %c0_67, %c0_68] : memref<2x32x64xbf16, #tpu.memory_space<vmem>>, vector<1x32x64xbf16>
    %237 = vector.shape_cast %236 : vector<1x32x64xbf16> to vector<32x64xbf16>
    %cst_69 = arith.constant dense<0.000000e+00> : vector<16x64xf32>
    %238 = tpu.matmul %235, %237, %cst_69 {dimension_numbers = #tpu.dot_dimension_numbers<[1], [0], [0], [1], [0, 0, 1, 1], [], []>} : vector<16x32xbf16>, vector<32x64xbf16>, vector<16x64xf32> -> vector<16x64xf32>
    %239 = vector.broadcast %138 : vector<1x64xf32> to vector<16x64xf32>
    %240 = arith.addf %238, %239 : vector<16x64xf32>
    %cst_70 = arith.constant 5.000000e-01 : f32
    %241 = vector.broadcast %cst_70 : f32 to vector<16x64xf32>
    %242 = arith.mulf %241, %240 : vector<16x64xf32>
    %cst_71 = arith.constant 0.707106769 : f32
    %243 = vector.broadcast %cst_71 : f32 to vector<16x64xf32>
    %244 = arith.mulf %240, %243 : vector<16x64xf32>
    %245 = math.erf %244 : vector<16x64xf32>
    %cst_72 = arith.constant 1.000000e+00 : f32
    %246 = vector.broadcast %cst_72 : f32 to vector<16x64xf32>
    %247 = arith.addf %246, %245 : vector<16x64xf32>
    %248 = arith.mulf %242, %247 : vector<16x64xf32>
    %249 = arith.truncf %248 : vector<16x64xf32> to vector<16x64xbf16>
    %c1_73 = arith.constant 1 : index
    %c0_74 = arith.constant 0 : index
    %c0_75 = arith.constant 0 : index
    %250 = vector.load %arg6[%c1_73, %c0_74, %c0_75] : memref<2x64x32xbf16, #tpu.memory_space<vmem>>, vector<1x64x32xbf16>
    %251 = vector.shape_cast %250 : vector<1x64x32xbf16> to vector<64x32xbf16>
    %cst_76 = arith.constant dense<0.000000e+00> : vector<16x32xf32>
    %252 = tpu.matmul %249, %251, %cst_76 {dimension_numbers = #tpu.dot_dimension_numbers<[1], [0], [0], [1], [0, 0, 1, 1], [], []>} : vector<16x64xbf16>, vector<64x32xbf16>, vector<16x32xf32> -> vector<16x32xf32>
    %253 = vector.broadcast %139 : vector<1x32xf32> to vector<16x32xf32>
    %254 = arith.addf %252, %253 : vector<16x32xf32>
    %255 = arith.addf %212, %254 : vector<16x32xf32>
    %c0_77 = arith.constant 0 : index
    %c0_78 = arith.constant 0 : index
    %256 = vector.load %arg8[%c0_77, %c0_78] : memref<2x32xf32, #tpu.memory_space<vmem>>, vector<2x32xf32>
    %257 = vector.extract_strided_slice %256 {offsets = [0, 0], sizes = [1, 32], strides = [1, 1]} : vector<2x32xf32> to vector<1x32xf32>
    %258 = vector.extract_strided_slice %256 {offsets = [1, 0], sizes = [1, 32], strides = [1, 1]} : vector<2x32xf32> to vector<1x32xf32>
    %cst_79 = arith.constant dense<0.000000e+00> : vector<16xf32>
    %259 = vector.multi_reduction <add>, %255, %cst_79 [1] : vector<16x32xf32> to vector<16xf32>
    %260 = vector.shape_cast %259 : vector<16xf32> to vector<16x1xf32>
    %cst_80 = arith.constant 3.200000e+01 : f32
    %261 = vector.broadcast %cst_80 : f32 to vector<16x1xf32>
    %262 = arith.divf %260, %261 : vector<16x1xf32>
    %263 = vector.broadcast %262 : vector<16x1xf32> to vector<16x32xf32>
    %264 = arith.subf %255, %263 : vector<16x32xf32>
    %265 = arith.mulf %264, %264 : vector<16x32xf32>
    %cst_81 = arith.constant dense<0.000000e+00> : vector<16xf32>
    %266 = vector.multi_reduction <add>, %265, %cst_81 [1] : vector<16x32xf32> to vector<16xf32>
    %267 = vector.shape_cast %266 : vector<16xf32> to vector<16x1xf32>
    %cst_82 = arith.constant 3.200000e+01 : f32
    %268 = vector.broadcast %cst_82 : f32 to vector<16x1xf32>
    %269 = arith.divf %267, %268 : vector<16x1xf32>
    %270 = vector.broadcast %262 : vector<16x1xf32> to vector<16x32xf32>
    %271 = arith.subf %255, %270 : vector<16x32xf32>
    %cst_83 = arith.constant 9.99999974E-6 : f32
    %272 = vector.broadcast %cst_83 : f32 to vector<16x1xf32>
    %273 = arith.addf %269, %272 : vector<16x1xf32>
    %274 = math.rsqrt %273 : vector<16x1xf32>
    %275 = vector.broadcast %274 : vector<16x1xf32> to vector<16x32xf32>
    %276 = arith.mulf %271, %275 : vector<16x32xf32>
    %277 = vector.broadcast %257 : vector<1x32xf32> to vector<16x32xf32>
    %278 = arith.mulf %276, %277 : vector<16x32xf32>
    %279 = vector.broadcast %258 : vector<1x32xf32> to vector<16x32xf32>
    %280 = arith.addf %278, %279 : vector<16x32xf32>
    %c0_84 = arith.constant 0 : index
    %c0_85 = arith.constant 0 : index
    %281 = vector.load %arg9[%c0_84, %c0_85] : memref<16x32xf32, #tpu.memory_space<vmem>>, vector<16x32xf32>
    tpu.vector_store %arg9[%c0_84, %c0_85], %280 {strides = array<i32>} : memref<16x32xf32, #tpu.memory_space<vmem>>, vector<16x32xf32>,
    return
  }
}

</mosaic_0001>

<llo_original>
// kernel: tile.8
$region0: #{tile.8}
  #allocation0 [shape = 's32[1]{0}', space=sflag, size = 0x4, scoped, tag = 'scoped memory for tile.8']
  %s0 = inlined_call_operand.vmem [shape: f32[16,16], index: 0, kind: input, shape index: {}]
  %s1 = inlined_call_operand.vmem [shape: f32[4,16,4,16], index: 1, kind: output, shape index: {}]
  // Predicated region
  $region2: #{tile.8} parent=0 // pred_check
    _
  $region3: #{tile.8} parent=0 // pred_check_branch
    %3 = sbr.rel (0) target = $region5
  $region4: #{tile.8} parent=0 // pred_region
    _
  $region5: #{tile.8} parent=0 // pred_fallthru
    _
  %v4 = vld [vmem:[%s0] ss:$0 sm:$0xff]
  %5 = vst [vmem:[%s1] sm:$0xf] %v4
  %s6 = scalar_lea.vmem %s1, 64
  %7 = vst [vmem:[%s6] sm:$0xf] %v4
  %s8 = scalar_lea.vmem %s1, 128
  %9 = vst [vmem:[%s8] sm:$0xf] %v4
  %s10 = scalar_lea.vmem %s1, 192
  %11 = vst [vmem:[%s10] sm:$0xf] %v4
  %s12 = scalar_lea.vmem %s0, 1
  %v13 = vld [vmem:[%s12] ss:$0 sm:$0xff]
  %s14 = scalar_lea.vmem %s1, 4
  %15 = vst [vmem:[%s14] sm:$0xf] %v13
  %s16 = scalar_lea.vmem %s1, 68
  %17 = vst [vmem:[%s16] sm:$0xf] %v13
  %s18 = scalar_lea.vmem %s1, 132
  %19 = vst [vmem:[%s18] sm:$0xf] %v13
  %s20 = scalar_lea.vmem %s1, 196
  %21 = vst [vmem:[%s20] sm:$0xf] %v13
  %s22 = scalar_lea.vmem %s0, 2
  %v23 = vld [vmem:[%s22] ss:$0 sm:$0xff]
  %s24 = scalar_lea.vmem %s1, 8
  %25 = vst [vmem:[%s24] sm:$0xf] %v23
  %s26 = scalar_lea.vmem %s1, 72
  %27 = vst [vmem:[%s26] sm:$0xf] %v23
  %s28 = scalar_lea.vmem %s1, 136
  %29 = vst [vmem:[%s28] sm:$0xf] %v23
  %s30 = scalar_lea.vmem %s1, 200
  %31 = vst [vmem:[%s30] sm:$0xf] %v23
  %s32 = scalar_lea.vmem %s0, 3
  %v33 = vld [vmem:[%s32] ss:$0 sm:$0xff]
  %s34 = scalar_lea.vmem %s1, 12
  %35 = vst [vmem:[%s34] sm:$0xf] %v33
  %s36 = scalar_lea.vmem %s1, 76
  %37 = vst [vmem:[%s36] sm:$0xf] %v33
  %s38 = scalar_lea.vmem %s1, 140
  %39 = vst [vmem:[%s38] sm:$0xf] %v33
  %s40 = scalar_lea.vmem %s1, 204
  %41 = vst [vmem:[%s40] sm:$0xf] %v33
  %s42 = scalar_lea.vmem %s0, 4
  %v43 = vld [vmem:[%s42] ss:$0 sm:$0xff]
  %s44 = scalar_lea.vmem %s1, 16
  %45 = vst [vmem:[%s44] sm:$0xf] %v43
  %s46 = scalar_lea.vmem %s1, 80
  %47 = vst [vmem:[%s46] sm:$0xf] %v43
  %s48 = scalar_lea.vmem %s1, 144
  %49 = vst [vmem:[%s48] sm:$0xf] %v43
  %s50 = scalar_lea.vmem %s1, 208
  %51 = vst [vmem:[%s50] sm:$0xf] %v43
  %s52 = scalar_lea.vmem %s0, 5
  %v53 = vld [vmem:[%s52] ss:$0 sm:$0xff]
  %s54 = scalar_lea.vmem %s1, 20
  %55 = vst [vmem:[%s54] sm:$0xf] %v53
  %s56 = scalar_lea.vmem %s1, 84
  %57 = vst [vmem:[%s56] sm:$0xf] %v53
  %s58 = scalar_lea.vmem %s1, 148
  %59 = vst [vmem:[%s58] sm:$0xf] %v53
  %s60 = scalar_lea.vmem %s1, 212
  %61 = vst [vmem:[%s60] sm:$0xf] %v53
  %s62 = scalar_lea.vmem %s0, 6
  %v63 = vld [vmem:[%s62] ss:$0 sm:$0xff]
  %s64 = scalar_lea.vmem %s1, 24
  %65 = vst [vmem:[%s64] sm:$0xf] %v63
  %s66 = scalar_lea.vmem %s1, 88
  %67 = vst [vmem:[%s66] sm:$0xf] %v63
  %s68 = scalar_lea.vmem %s1, 152
  %69 = vst [vmem:[%s68] sm:$0xf] %v63
  %s70 = scalar_lea.vmem %s1, 216
  %71 = vst [vmem:[%s70] sm:$0xf] %v63
  %s72 = scalar_lea.vmem %s0, 7
  %v73 = vld [vmem:[%s72] ss:$0 sm:$0xff]
  %s74 = scalar_lea.vmem %s1, 28
  %75 = vst [vmem:[%s74] sm:$0xf] %v73
  %s76 = scalar_lea.vmem %s1, 92
  %77 = vst [vmem:[%s76] sm:$0xf] %v73
  %s78 = scalar_lea.vmem %s1, 156
  %79 = vst [vmem:[%s78] sm:$0xf] %v73
  %s80 = scalar_lea.vmem %s1, 220
  %81 = vst [vmem:[%s80] sm:$0xf] %v73
  %s82 = scalar_lea.vmem %s0, 8
  %v83 = vld [vmem:[%s82] ss:$0 sm:$0xff]
  %s84 = scalar_lea.vmem %s1, 32
  %85 = vst [vmem:[%s84] sm:$0xf] %v83
  %s86 = scalar_lea.vmem %s1, 96
  %87 = vst [vmem:[%s86] sm:$0xf] %v83
  %s88 = scalar_lea.vmem %s1, 160
  %89 = vst [vmem:[%s88] sm:$0xf] %v83
  %s90 = scalar_lea.vmem %s1, 224
  %91 = vst [vmem:[%s90] sm:$0xf] %v83
  %s92 = scalar_lea.vmem %s0, 8
  %s93 = scalar_lea.vmem %s92, 1
  %v94 = vld [vmem:[%s93] ss:$0 sm:$0xff]
  %s95 = scalar_lea.vmem %s1, 36
  %96 = vst [vmem:[%s95] sm:$0xf] %v94
  %s97 = scalar_lea.vmem %s1, 100
  %98 = vst [vmem:[%s97] sm:$0xf] %v94
  %s99 = scalar_lea.vmem %s1, 164
  %100 = vst [vmem:[%s99] sm:$0xf] %v94
  %s101 = scalar_lea.vmem %s1, 228
  %102 = vst [vmem:[%s101] sm:$0xf] %v94
  %s103 = scalar_lea.vmem %s0, 8
  %s104 = scalar_lea.vmem %s103, 2
  %v105 = vld [vmem:[%s104] ss:$0 sm:$0xff]
  %s106 = scalar_lea.vmem %s1, 40
  %107 = vst [vmem:[%s106] sm:$0xf] %v105
  %s108 = scalar_lea.vmem %s1, 104
  %109 = vst [vmem:[%s108] sm:$0xf] %v105
  %s110 = scalar_lea.vmem %s1, 168
  %111 = vst [vmem:[%s110] sm:$0xf] %v105
  %s112 = scalar_lea.vmem %s1, 232
  %113 = vst [vmem:[%s112] sm:$0xf] %v105
  %s114 = scalar_lea.vmem %s0, 8
  %s115 = scalar_lea.vmem %s114, 3
  %v116 = vld [vmem:[%s115] ss:$0 sm:$0xff]
  %s117 = scalar_lea.vmem %s1, 44
  %118 = vst [vmem:[%s117] sm:$0xf] %v116
  %s119 = scalar_lea.vmem %s1, 108
  %120 = vst [vmem:[%s119] sm:$0xf] %v116
  %s121 = scalar_lea.vmem %s1, 172
  %122 = vst [vmem:[%s121] sm:$0xf] %v116
  %s123 = scalar_lea.vmem %s1, 236
  %124 = vst [vmem:[%s123] sm:$0xf] %v116
  %s125 = scalar_lea.vmem %s0, 8
  %s126 = scalar_lea.vmem %s125, 4
  %v127 = vld [vmem:[%s126] ss:$0 sm:$0xff]
  %s128 = scalar_lea.vmem %s1, 48
  %129 = vst [vmem:[%s128] sm:$0xf] %v127
  %s130 = scalar_lea.vmem %s1, 112
  %131 = vst [vmem:[%s130] sm:$0xf] %v127
  %s132 = scalar_lea.vmem %s1, 176
  %133 = vst [vmem:[%s132] sm:$0xf] %v127
  %s134 = scalar_lea.vmem %s1, 240
  %135 = vst [vmem:[%s134] sm:$0xf] %v127
  %s136 = scalar_lea.vmem %s0, 8
  %s137 = scalar_lea.vmem %s136, 5
  %v138 = vld [vmem:[%s137] ss:$0 sm:$0xff]
  %s139 = scalar_lea.vmem %s1, 52
  %140 = vst [vmem:[%s139] sm:$0xf] %v138
  %s141 = scalar_lea.vmem %s1, 116
  %142 = vst [vmem:[%s141] sm:$0xf] %v138
  %s143 = scalar_lea.vmem %s1, 180
  %144 = vst [vmem:[%s143] sm:$0xf] %v138
  %s145 = scalar_lea.vmem %s1, 244
  %146 = vst [vmem:[%s145] sm:$0xf] %v138
  %s147 = scalar_lea.vmem %s0, 8
  %s148 = scalar_lea.vmem %s147, 6
  %v149 = vld [vmem:[%s148] ss:$0 sm:$0xff]
  %s150 = scalar_lea.vmem %s1, 56
  %151 = vst [vmem:[%s150] sm:$0xf] %v149
  %s152 = scalar_lea.vmem %s1, 120
  %153 = vst [vmem:[%s152] sm:$0xf] %v149
  %s154 = scalar_lea.vmem %s1, 184
  %155 = vst [vmem:[%s154] sm:$0xf] %v149
  %s156 = scalar_lea.vmem %s1, 248
  %157 = vst [vmem:[%s156] sm:$0xf] %v149
  %s158 = scalar_lea.vmem %s0, 8
  %s159 = scalar_lea.vmem %s158, 7
  %v160 = vld [vmem:[%s159] ss:$0 sm:$0xff]
  %s161 = scalar_lea.vmem %s1, 60
  %162 = vst [vmem:[%s161] sm:$0xf] %v160
  %s163 = scalar_lea.vmem %s1, 124
  %164 = vst [vmem:[%s163] sm:$0xf] %v160
  %s165 = scalar_lea.vmem %s1, 188
  %166 = vst [vmem:[%s165] sm:$0xf] %v160
  %s167 = scalar_lea.vmem %s1, 252
  %168 = vst [vmem:[%s167] sm:$0xf] %v160

// kernel: tile.9
$region0: #{tile.9}
  %s0 = inlined_call_operand.vmem [shape: f32[4,16,4,16], index: 0, kind: input, shape index: {}]
  %s1 = inlined_call_operand.vmem [shape: f32[64,64], index: 1, kind: output, shape index: {}]
  $region1: #{tile.9} parent=0
    #allocation0 [shape = 'u8[262144]{0}', space=vmem, size = 0x40000, scoped, tag = 'scoped mem for input reshape']
    %s3 = sshllo.u32 0, 4
    %s4 = smul.addr 4, 63
    %s5 = scalar_lea.vmem %s0, %s4
    %v6 = vld [vmem:[%s5] sm:%s3]
    %s7 = scalar_lea.vmem [#allocation0], 504
    %8 = vst [vmem:[%s7] sm:%s3] %v6
    %s9 = smul.addr 4, 62
    %s10 = scalar_lea.vmem %s0, %s9
    %v11 = vld [vmem:[%s10] sm:%s3]
    %s12 = scalar_lea.vmem [#allocation0], 496
    %13 = vst [vmem:[%s12] sm:%s3] %v11
    %s14 = smul.addr 4, 61
    %s15 = scalar_lea.vmem %s0, %s14
    %v16 = vld [vmem:[%s15] sm:%s3]
    %s17 = scalar_lea.vmem [#allocation0], 488
    %18 = vst [vmem:[%s17] sm:%s3] %v16
    %s19 = smul.addr 4, 60
    %s20 = scalar_lea.vmem %s0, %s19
    %v21 = vld [vmem:[%s20] sm:%s3]
    %s22 = scalar_lea.vmem [#allocation0], 480
    %23 = vst [vmem:[%s22] sm:%s3] %v21
    %s24 = smul.addr 4, 59
    %s25 = scalar_lea.vmem %s0, %s24
    %v26 = vld [vmem:[%s25] sm:%s3]
    %s27 = scalar_lea.vmem [#allocation0], 472
    %28 = vst [vmem:[%s27] sm:%s3] %v26
    %s29 = smul.addr 4, 58
    %s30 = scalar_lea.vmem %s0, %s29
    %v31 = vld [vmem:[%s30] sm:%s3]
    %s32 = scalar_lea.vmem [#allocation0], 464
    %33 = vst [vmem:[%s32] sm:%s3] %v31
    %s34 = smul.addr 4, 57
    %s35 = scalar_lea.vmem %s0, %s34
    %v36 = vld [vmem:[%s35] sm:%s3]
    %s37 = scalar_lea.vmem [#allocation0], 456
    %38 = vst [vmem:[%s37] sm:%s3] %v36
    %s39 = smul.addr 4, 56
    %s40 = scalar_lea.vmem %s0, %s39
    %v41 = vld [vmem:[%s40] sm:%s3]
    %s42 = scalar_lea.vmem [#allocation0], 448
    %43 = vst [vmem:[%s42] sm:%s3] %v41
    %s44 = smul.addr 4, 55
    %s45 = scalar_lea.vmem %s0, %s44
    %v46 = vld [vmem:[%s45] sm:%s3]
    %s47 = scalar_lea.vmem [#allocation0], 440
    %48 = vst [vmem:[%s47] sm:%s3] %v46
    %s49 = smul.addr 4, 54
    %s50 = scalar_lea.vmem %s0, %s49
    %v51 = vld [vmem:[%s50] sm:%s3]
    %s52 = scalar_lea.vmem [#allocation0], 432
    %53 = vst [vmem:[%s52] sm:%s3] %v51
    %s54 = smul.addr 4, 53
    %s55 = scalar_lea.vmem %s0, %s54
    %v56 = vld [vmem:[%s55] sm:%s3]
    %s57 = scalar_lea.vmem [#allocation0], 424
    %58 = vst [vmem:[%s57] sm:%s3] %v56
    %s59 = smul.addr 4, 52
    %s60 = scalar_lea.vmem %s0, %s59
    %v61 = vld [vmem:[%s60] sm:%s3]
    %s62 = scalar_lea.vmem [#allocation0], 416
    %63 = vst [vmem:[%s62] sm:%s3] %v61
    %s64 = smul.addr 4, 51
    %s65 = scalar_lea.vmem %s0, %s64
    %v66 = vld [vmem:[%s65] sm:%s3]
    %s67 = scalar_lea.vmem [#allocation0], 408
    %68 = vst [vmem:[%s67] sm:%s3] %v66
    %s69 = smul.addr 4, 50
    %s70 = scalar_lea.vmem %s0, %s69
    %v71 = vld [vmem:[%s70] sm:%s3]
    %s72 = scalar_lea.vmem [#allocation0], 400
    %73 = vst [vmem:[%s72] sm:%s3] %v71
    %s74 = smul.addr 4, 49
    %s75 = scalar_lea.vmem %s0, %s74
    %v76 = vld [vmem:[%s75] sm:%s3]
    %s77 = scalar_lea.vmem [#allocation0], 392
    %78 = vst [vmem:[%s77] sm:%s3] %v76
    %s79 = smul.addr 4, 48
    %s80 = scalar_lea.vmem %s0, %s79
    %v81 = vld [vmem:[%s80] sm:%s3]
    %s82 = scalar_lea.vmem [#allocation0], 384
    %83 = vst [vmem:[%s82] sm:%s3] %v81
    %s84 = smul.addr 4, 47
    %s85 = scalar_lea.vmem %s0, %s84
    %v86 = vld [vmem:[%s85] sm:%s3]
    %s87 = scalar_lea.vmem [#allocation0], 376
    %88 = vst [vmem:[%s87] sm:%s3] %v86
    %s89 = smul.addr 4, 46
    %s90 = scalar_lea.vmem %s0, %s89
    %v91 = vld [vmem:[%s90] sm:%s3]
    %s92 = scalar_lea.vmem [#allocation0], 368
    %93 = vst [vmem:[%s92] sm:%s3] %v91
    %s94 = smul.addr 4, 45
    %s95 = scalar_lea.vmem %s0, %s94
    %v96 = vld [vmem:[%s95] sm:%s3]
    %s97 = scalar_lea.vmem [#allocation0], 360
    %98 = vst [vmem:[%s97] sm:%s3] %v96
    %s99 = smul.addr 4, 44
    %s100 = scalar_lea.vmem %s0, %s99
    %v101 = vld [vmem:[%s100] sm:%s3]
    %s102 = scalar_lea.vmem [#allocation0], 352
    %103 = vst [vmem:[%s102] sm:%s3] %v101
    %s104 = smul.addr 4, 43
    %s105 = scalar_lea.vmem %s0, %s104
    %v106 = vld [vmem:[%s105] sm:%s3]
    %s107 = scalar_lea.vmem [#allocation0], 344
    %108 = vst [vmem:[%s107] sm:%s3] %v106
    %s109 = smul.addr 4, 42
    %s110 = scalar_lea.vmem %s0, %s109
    %v111 = vld [vmem:[%s110] sm:%s3]
    %s112 = scalar_lea.vmem [#allocation0], 336
    %113 = vst [vmem:[%s112] sm:%s3] %v111
    %s114 = smul.addr 4, 41
    %s115 = scalar_lea.vmem %s0, %s114
    %v116 = vld [vmem:[%s115] sm:%s3]
    %s117 = scalar_lea.vmem [#allocation0], 328
    %118 = vst [vmem:[%s117] sm:%s3] %v116
    %s119 = smul.addr 4, 40
    %s120 = scalar_lea.vmem %s0, %s119
    %v121 = vld [vmem:[%s120] sm:%s3]
    %s122 = scalar_lea.vmem [#allocation0], 320
    %123 = vst [vmem:[%s122] sm:%s3] %v121
    %s124 = smul.addr 4, 39
    %s125 = scalar_lea.vmem %s0, %s124
    %v126 = vld [vmem:[%s125] sm:%s3]
    %s127 = scalar_lea.vmem [#allocation0], 312
    %128 = vst [vmem:[%s127] sm:%s3] %v126
    %s129 = smul.addr 4, 38
    %s130 = scalar_lea.vmem %s0, %s129
    %v131 = vld [vmem:[%s130] sm:%s3]
    %s132 = scalar_lea.vmem [#allocation0], 304
    %133 = vst [vmem:[%s132] sm:%s3] %v131
    %s134 = smul.addr 4, 37
    %s135 = scalar_lea.vmem %s0, %s134
    %v136 = vld [vmem:[%s135] sm:%s3]
    %s137 = scalar_lea.vmem [#allocation0], 296
    %138 = vst [vmem:[%s137] sm:%s3] %v136
    %s139 = smul.addr 4, 36
    %s140 = scalar_lea.vmem %s0, %s139
    %v141 = vld [vmem:[%s140] sm:%s3]
    %s142 = scalar_lea.vmem [#allocation0], 288
    %143 = vst [vmem:[%s142] sm:%s3] %v141
    %s144 = smul.addr 4, 35
    %s145 = scalar_lea.vmem %s0, %s144
    %v146 = vld [vmem:[%s145] sm:%s3]
    %s147 = scalar_lea.vmem [#allocation0], 280
    %148 = vst [vmem:[%s147] sm:%s3] %v146
    %s149 = smul.addr 4, 34
    %s150 = scalar_lea.vmem %s0, %s149
    %v151 = vld [vmem:[%s150] sm:%s3]
    %s152 = scalar_lea.vmem [#allocation0], 272
    %153 = vst [vmem:[%s152] sm:%s3] %v151
    %s154 = smul.addr 4, 33
    %s155 = scalar_lea.vmem %s0, %s154
    %v156 = vld [vmem:[%s155] sm:%s3]
    %s157 = scalar_lea.vmem [#allocation0], 264
    %158 = vst [vmem:[%s157] sm:%s3] %v156
    %s159 = smul.addr 4, 32
    %s160 = scalar_lea.vmem %s0, %s159
    %v161 = vld [vmem:[%s160] sm:%s3]
    %s162 = scalar_lea.vmem [#allocation0], 256
    %163 = vst [vmem:[%s162] sm:%s3] %v161
    %s164 = smul.addr 4, 31
    %s165 = scalar_lea.vmem %s0, %s164
    %v166 = vld [vmem:[%s165] sm:%s3]
    %s167 = scalar_lea.vmem [#allocation0], 248
    %168 = vst [vmem:[%s167] sm:%s3] %v166
    %s169 = smul.addr 4, 30
    %s170 = scalar_lea.vmem %s0, %s169
    %v171 = vld [vmem:[%s170] sm:%s3]
    %s172 = scalar_lea.vmem [#allocation0], 240
    %173 = vst [vmem:[%s172] sm:%s3] %v171
    %s174 = smul.addr 4, 29
    %s175 = scalar_lea.vmem %s0, %s174
    %v176 = vld [vmem:[%s175] sm:%s3]
    %s177 = scalar_lea.vmem [#allocation0], 232
    %178 = vst [vmem:[%s177] sm:%s3] %v176
    %s179 = smul.addr 4, 28
    %s180 = scalar_lea.vmem %s0, %s179
    %v181 = vld [vmem:[%s180] sm:%s3]
    %s182 = scalar_lea.vmem [#allocation0], 224
    %183 = vst [vmem:[%s182] sm:%s3] %v181
    %s184 = smul.addr 4, 27
    %s185 = scalar_lea.vmem %s0, %s184
    %v186 = vld [vmem:[%s185] sm:%s3]
    %s187 = scalar_lea.vmem [#allocation0], 216
    %188 = vst [vmem:[%s187] sm:%s3] %v186
    %s189 = smul.addr 4, 26
    %s190 = scalar_lea.vmem %s0, %s189
    %v191 = vld [vmem:[%s190] sm:%s3]
    %s192 = scalar_lea.vmem [#allocation0], 208
    %193 = vst [vmem:[%s192] sm:%s3] %v191
    %s194 = smul.addr 4, 25
    %s195 = scalar_lea.vmem %s0, %s194
    %v196 = vld [vmem:[%s195] sm:%s3]
    %s197 = scalar_lea.vmem [#allocation0], 200
    %198 = vst [vmem:[%s197] sm:%s3] %v196
    %s199 = smul.addr 4, 24
    %s200 = scalar_lea.vmem %s0, %s199
    %v201 = vld [vmem:[%s200] sm:%s3]
    %s202 = scalar_lea.vmem [#allocation0], 192
    %203 = vst [vmem:[%s202] sm:%s3] %v201
    %s204 = smul.addr 4, 23
    %s205 = scalar_lea.vmem %s0, %s204
    %v206 = vld [vmem:[%s205] sm:%s3]
    %s207 = scalar_lea.vmem [#allocation0], 184
    %208 = vst [vmem:[%s207] sm:%s3] %v206
    %s209 = smul.addr 4, 22
    %s210 = scalar_lea.vmem %s0, %s209
    %v211 = vld [vmem:[%s210] sm:%s3]
    %s212 = scalar_lea.vmem [#allocation0], 176
    %213 = vst [vmem:[%s212] sm:%s3] %v211
    %s214 = smul.addr 4, 21
    %s215 = scalar_lea.vmem %s0, %s214
    %v216 = vld [vmem:[%s215] sm:%s3]
    %s217 = scalar_lea.vmem [#allocation0], 168
    %218 = vst [vmem:[%s217] sm:%s3] %v216
    %s219 = smul.addr 4, 20
    %s220 = scalar_lea.vmem %s0, %s219
    %v221 = vld [vmem:[%s220] sm:%s3]
    %s222 = scalar_lea.vmem [#allocation0], 160
    %223 = vst [vmem:[%s222] sm:%s3] %v221
    %s224 = smul.addr 4, 19
    %s225 = scalar_lea.vmem %s0, %s224
    %v226 = vld [vmem:[%s225] sm:%s3]
    %s227 = scalar_lea.vmem [#allocation0], 152
    %228 = vst [vmem:[%s227] sm:%s3] %v226
    %s229 = smul.addr 4, 18
    %s230 = scalar_lea.vmem %s0, %s229
    %v231 = vld [vmem:[%s230] sm:%s3]
    %s232 = scalar_lea.vmem [#allocation0], 144
    %233 = vst [vmem:[%s232] sm:%s3] %v231
    %s234 = smul.addr 4, 17
    %s235 = scalar_lea.vmem %s0, %s234
    %v236 = vld [vmem:[%s235] sm:%s3]
    %s237 = scalar_lea.vmem [#allocation0], 136
    %238 = vst [vmem:[%s237] sm:%s3] %v236
    %s239 = smul.addr 4, 16
    %s240 = scalar_lea.vmem %s0, %s239
    %v241 = vld [vmem:[%s240] sm:%s3]
    %s242 = scalar_lea.vmem [#allocation0], 128
    %243 = vst [vmem:[%s242] sm:%s3] %v241
    %s244 = smul.addr 4, 15
    %s245 = scalar_lea.vmem %s0, %s244
    %v246 = vld [vmem:[%s245] sm:%s3]
    %s247 = scalar_lea.vmem [#allocation0], 120
    %248 = vst [vmem:[%s247] sm:%s3] %v246
    %s249 = smul.addr 4, 14
    %s250 = scalar_lea.vmem %s0, %s249
    %v251 = vld [vmem:[%s250] sm:%s3]
    %s252 = scalar_lea.vmem [#allocation0], 112
    %253 = vst [vmem:[%s252] sm:%s3] %v251
    %s254 = smul.addr 4, 13
    %s255 = scalar_lea.vmem %s0, %s254
    %v256 = vld [vmem:[%s255] sm:%s3]
    %s257 = scalar_lea.vmem [#allocation0], 104
    %258 = vst [vmem:[%s257] sm:%s3] %v256
    %s259 = smul.addr 4, 12
    %s260 = scalar_lea.vmem %s0, %s259
    %v261 = vld [vmem:[%s260] sm:%s3]
    %s262 = scalar_lea.vmem [#allocation0], 96
    %263 = vst [vmem:[%s262] sm:%s3] %v261
    %s264 = smul.addr 4, 11
    %s265 = scalar_lea.vmem %s0, %s264
    %v266 = vld [vmem:[%s265] sm:%s3]
    %s267 = scalar_lea.vmem [#allocation0], 88
    %268 = vst [vmem:[%s267] sm:%s3] %v266
    %s269 = smul.addr 4, 10
    %s270 = scalar_lea.vmem %s0, %s269
    %v271 = vld [vmem:[%s270] sm:%s3]
    %s272 = scalar_lea.vmem [#allocation0], 80
    %273 = vst [vmem:[%s272] sm:%s3] %v271
    %s274 = smul.addr 4, 9
    %s275 = scalar_lea.vmem %s0, %s274
    %v276 = vld [vmem:[%s275] sm:%s3]
    %s277 = scalar_lea.vmem [#allocation0], 72
    %278 = vst [vmem:[%s277] sm:%s3] %v276
    %s279 = smul.addr 4, 8
    %s280 = scalar_lea.vmem %s0, %s279
    %v281 = vld [vmem:[%s280] sm:%s3]
    %s282 = scalar_lea.vmem [#allocation0], 64
    %283 = vst [vmem:[%s282] sm:%s3] %v281
    %s284 = smul.addr 4, 7
    %s285 = scalar_lea.vmem %s0, %s284
    %v286 = vld [vmem:[%s285] sm:%s3]
    %s287 = scalar_lea.vmem [#allocation0], 56
    %288 = vst [vmem:[%s287] sm:%s3] %v286
    %s289 = smul.addr 4, 6
    %s290 = scalar_lea.vmem %s0, %s289
    %v291 = vld [vmem:[%s290] sm:%s3]
    %s292 = scalar_lea.vmem [#allocation0], 48
    %293 = vst [vmem:[%s292] sm:%s3] %v291
    %s294 = smul.addr 4, 5
    %s295 = scalar_lea.vmem %s0, %s294
    %v296 = vld [vmem:[%s295] sm:%s3]
    %s297 = scalar_lea.vmem [#allocation0], 40
    %298 = vst [vmem:[%s297] sm:%s3] %v296
    %s299 = smul.addr 4, 4
    %s300 = scalar_lea.vmem %s0, %s299
    %v301 = vld [vmem:[%s300] sm:%s3]
    %s302 = scalar_lea.vmem [#allocation0], 32
    %303 = vst [vmem:[%s302] sm:%s3] %v301
    %s304 = smul.addr 4, 3
    %s305 = scalar_lea.vmem %s0, %s304
    %v306 = vld [vmem:[%s305] sm:%s3]
    %s307 = scalar_lea.vmem [#allocation0], 24
    %308 = vst [vmem:[%s307] sm:%s3] %v306
    %s309 = smul.addr 4, 2
    %s310 = scalar_lea.vmem %s0, %s309
    %v311 = vld [vmem:[%s310] sm:%s3]
    %s312 = scalar_lea.vmem [#allocation0], 16
    %313 = vst [vmem:[%s312] sm:%s3] %v311
    %s314 = scalar_lea.vmem %s0, 4
    %v315 = vld [vmem:[%s314] sm:%s3]
    %s316 = scalar_lea.vmem [#allocation0], 8
    %317 = vst [vmem:[%s316] sm:%s3] %v315
    %v318 = vld [vmem:[%s0] sm:%s3]
    %319 = vst [vmem:[#allocation0] sm:%s3] %v318
    %v320 = vld [vmem:[#allocation0] ss:$8 sm:$0xf]
    %v321 = vld [vmem:[#allocation0] ss:$8 sm:$0xf0]
    %vm322 = vcmask 1047556
    %v323 = vsel %vm322, %v321, %v320
    %vm324 = vcmask 130048
    %325 = vst.msk [vmem:[%s1] sm:$0xff] %vm324, %v323
    %s326 = scalar_lea.vmem [#allocation0], 64
    %v327 = vld [vmem:[%s326] ss:$8 sm:$0xf]
    %s328 = scalar_lea.vmem [#allocation0], 64
    %v329 = vld [vmem:[%s328] ss:$8 sm:$0xf0]
    %vm330 = vcmask 1047556
    %v331 = vsel %vm330, %v329, %v327
    %vm332 = vcmask 130048
    %s333 = scalar_lea.vmem %s1, 8
    %334 = vst.msk [vmem:[%s333] sm:$0xff] %vm332, %v331
    %s335 = scalar_lea.vmem [#allocation0], 128
    %v336 = vld [vmem:[%s335] ss:$8 sm:$0xf]
    %s337 = scalar_lea.vmem [#allocation0], 128
    %v338 = vld [vmem:[%s337] ss:$8 sm:$0xf0]
    %vm339 = vcmask 1047556
    %v340 = vsel %vm339, %v338, %v336
    %vm341 = vcmask 130048
    %s342 = scalar_lea.vmem %s1, 16
    %343 = vst.msk [vmem:[%s342] sm:$0xff] %vm341, %v340
    %s344 = scalar_lea.vmem [#allocation0], 192
    %v345 = vld [vmem:[%s344] ss:$8 sm:$0xf]
    %s346 = scalar_lea.vmem [#allocation0], 192
    %v347 = vld [vmem:[%s346] ss:$8 sm:$0xf0]
    %vm348 = vcmask 1047556
    %v349 = vsel %vm348, %v347, %v345
    %vm350 = vcmask 130048
    %s351 = scalar_lea.vmem %s1, 24
    %352 = vst.msk [vmem:[%s351] sm:$0xff] %vm350, %v349
    %s353 = scalar_lea.vmem [#allocation0], 256
    %v354 = vld [vmem:[%s353] ss:$8 sm:$0xf]
    %s355 = scalar_lea.vmem [#allocation0], 256
    %v356 = vld [vmem:[%s355] ss:$8 sm:$0xf0]
    %vm357 = vcmask 1047556
    %v358 = vsel %vm357, %v356, %v354
    %vm359 = vcmask 130048
    %s360 = scalar_lea.vmem %s1, 32
    %361 = vst.msk [vmem:[%s360] sm:$0xff] %vm359, %v358
    %s362 = scalar_lea.vmem [#allocation0], 320
    %v363 = vld [vmem:[%s362] ss:$8 sm:$0xf]
    %s364 = scalar_lea.vmem [#allocation0], 320
    %v365 = vld [vmem:[%s364] ss:$8 sm:$0xf0]
    %vm366 = vcmask 1047556
    %v367 = vsel %vm366, %v365, %v363
    %vm368 = vcmask 130048
    %s369 = scalar_lea.vmem %s1, 40
    %370 = vst.msk [vmem:[%s369] sm:$0xff] %vm368, %v367
    %s371 = scalar_lea.vmem [#allocation0], 384
    %v372 = vld [vmem:[%s371] ss:$8 sm:$0xf]
    %s373 = scalar_lea.vmem [#allocation0], 384
    %v374 = vld [vmem:[%s373] ss:$8 sm:$0xf0]
    %vm375 = vcmask 1047556
    %v376 = vsel %vm375, %v374, %v372
    %vm377 = vcmask 130048
    %s378 = scalar_lea.vmem %s1, 48
    %379 = vst.msk [vmem:[%s378] sm:$0xff] %vm377, %v376
    %s380 = scalar_lea.vmem [#allocation0], 448
    %v381 = vld [vmem:[%s380] ss:$8 sm:$0xf]
    %s382 = scalar_lea.vmem [#allocation0], 448
    %v383 = vld [vmem:[%s382] ss:$8 sm:$0xf0]
    %vm384 = vcmask 1047556
    %v385 = vsel %vm384, %v383, %v381
    %vm386 = vcmask 130048
    %s387 = scalar_lea.vmem %s1, 56
    %388 = vst.msk [vmem:[%s387] sm:$0xff] %vm386, %v385
    %s389 = scalar_lea.vmem [#allocation0], 3
    %v390 = vld [vmem:[%s389] ss:$8 sm:$0xf]
    %s391 = scalar_lea.vmem [#allocation0], 3
    %v392 = vld [vmem:[%s391] ss:$8 sm:$0xf0]
    %vm393 = vcmask 1047556
    %v394 = vsel %vm393, %v392, %v390
    %395 = vrot.lane.b32.xlu0 %v394, 48
    %v396 = vpop.permute.xlu0 %395
    %vm397 = vcmask 523648
    %398 = vst.msk [vmem:[%s1] sm:$0xff] %vm397, %v396
    %s399 = scalar_lea.vmem [#allocation0], 259
    %v400 = vld [vmem:[%s399] ss:$8 sm:$0xf]
    %s401 = scalar_lea.vmem [#allocation0], 259
    %v402 = vld [vmem:[%s401] ss:$8 sm:$0xf0]
    %vm403 = vcmask 1047556
    %v404 = vsel %vm403, %v402, %v400
    %405 = vrot.lane.b32.xlu0 %v404, 48
    %v406 = vpop.permute.xlu0 %405
    %vm407 = vcmask 523648
    %s408 = scalar_lea.vmem %s1, 32
    %409 = vst.msk [vmem:[%s408] sm:$0xff] %vm407, %v406
    %s410 = scalar_lea.vmem [#allocation0], 67
    %v411 = vld [vmem:[%s410] ss:$8 sm:$0xf]
    %s412 = scalar_lea.vmem [#allocation0], 67
    %v413 = vld [vmem:[%s412] ss:$8 sm:$0xf0]
    %vm414 = vcmask 1047556
    %v415 = vsel %vm414, %v413, %v411
    %416 = vrot.lane.b32.xlu0 %v415, 48
    %v417 = vpop.permute.xlu0 %416
    %vm418 = vcmask 523648
    %s419 = scalar_lea.vmem %s1, 8
    %420 = vst.msk [vmem:[%s419] sm:$0xff] %vm418, %v417
    %s421 = scalar_lea.vmem [#allocation0], 323
    %v422 = vld [vmem:[%s421] ss:$8 sm:$0xf]
    %s423 = scalar_lea.vmem [#allocation0], 323
    %v424 = vld [vmem:[%s423] ss:$8 sm:$0xf0]
    %vm425 = vcmask 1047556
    %v426 = vsel %vm425, %v424, %v422
    %427 = vrot.lane.b32.xlu0 %v426, 48
    %v428 = vpop.permute.xlu0 %427
    %vm429 = vcmask 523648
    %s430 = scalar_lea.vmem %s1, 40
    %431 = vst.msk [vmem:[%s430] sm:$0xff] %vm429, %v428
    %s432 = scalar_lea.vmem [#allocation0], 131
    %v433 = vld [vmem:[%s432] ss:$8 sm:$0xf]
    %s434 = scalar_lea.vmem [#allocation0], 131
    %v435 = vld [vmem:[%s434] ss:$8 sm:$0xf0]
    %vm436 = vcmask 1047556
    %v437 = vsel %vm436, %v435, %v433
    %438 = vrot.lane.b32.xlu0 %v437, 48
    %v439 = vpop.permute.xlu0 %438
    %vm440 = vcmask 523648
    %s441 = scalar_lea.vmem %s1, 16
    %442 = vst.msk [vmem:[%s441] sm:$0xff] %vm440, %v439
    %s443 = scalar_lea.vmem [#allocation0], 387
    %v444 = vld [vmem:[%s443] ss:$8 sm:$0xf]
    %s445 = scalar_lea.vmem [#allocation0], 387
    %v446 = vld [vmem:[%s445] ss:$8 sm:$0xf0]
    %vm447 = vcmask 1047556
    %v448 = vsel %vm447, %v446, %v444
    %449 = vrot.lane.b32.xlu0 %v448, 48
    %v450 = vpop.permute.xlu0 %449
    %vm451 = vcmask 523648
    %s452 = scalar_lea.vmem %s1, 48
    %453 = vst.msk [vmem:[%s452] sm:$0xff] %vm451, %v450
    %s454 = scalar_lea.vmem [#allocation0], 195
    %v455 = vld [vmem:[%s454] ss:$8 sm:$0xf]
    %s456 = scalar_lea.vmem [#allocation0], 195
    %v457 = vld [vmem:[%s456] ss:$8 sm:$0xf0]
    %vm458 = vcmask 1047556
    %v459 = vsel %vm458, %v457, %v455
    %460 = vrot.lane.b32.xlu0 %v459, 48
    %v461 = vpop.permute.xlu0 %460
    %vm462 = vcmask 523648
    %s463 = scalar_lea.vmem %s1, 24
    %464 = vst.msk [vmem:[%s463] sm:$0xff] %vm462, %v461
    %s465 = scalar_lea.vmem [#allocation0], 451
    %v466 = vld [vmem:[%s465] ss:$8 sm:$0xf]
    %s467 = scalar_lea.vmem [#allocation0], 451
    %v468 = vld [vmem:[%s467] ss:$8 sm:$0xf0]
    %vm469 = vcmask 1047556
    %v470 = vsel %vm469, %v468, %v466
    %471 = vrot.lane.b32.xlu0 %v470, 48
    %v472 = vpop.permute.xlu0 %471
    %vm473 = vcmask 523648
    %s474 = scalar_lea.vmem %s1, 56
    %475 = vst.msk [vmem:[%s474] sm:$0xff] %vm473, %v472
    %s476 = scalar_lea.vmem [#allocation0], 2
    %v477 = vld [vmem:[%s476] ss:$8 sm:$0xf]
    %s478 = scalar_lea.vmem [#allocation0], 2
    %v479 = vld [vmem:[%s478] ss:$8 sm:$0xf0]
    %vm480 = vcmask 1047556
    %v481 = vsel %vm480, %v479, %v477
    %482 = vrot.lane.b32.xlu0 %v481, 32
    %v483 = vpop.permute.xlu0 %482
    %vm484 = vcmask 392448
    %485 = vst.msk [vmem:[%s1] sm:$0xff] %vm484, %v483
    %s486 = scalar_lea.vmem [#allocation0], 258
    %v487 = vld [vmem:[%s486] ss:$8 sm:$0xf]
    %s488 = scalar_lea.vmem [#allocation0], 258
    %v489 = vld [vmem:[%s488] ss:$8 sm:$0xf0]
    %vm490 = vcmask 1047556
    %v491 = vsel %vm490, %v489, %v487
    %492 = vrot.lane.b32.xlu0 %v491, 32
    %v493 = vpop.permute.xlu0 %492
    %vm494 = vcmask 392448
    %s495 = scalar_lea.vmem %s1, 32
    %496 = vst.msk [vmem:[%s495] sm:$0xff] %vm494, %v493
    %s497 = scalar_lea.vmem [#allocation0], 66
    %v498 = vld [vmem:[%s497] ss:$8 sm:$0xf]
    %s499 = scalar_lea.vmem [#allocation0], 66
    %v500 = vld [vmem:[%s499] ss:$8 sm:$0xf0]
    %vm501 = vcmask 1047556
    %v502 = vsel %vm501, %v500, %v498
    %503 = vrot.lane.b32.xlu0 %v502, 32
    %v504 = vpop.permute.xlu0 %503
    %vm505 = vcmask 392448
    %s506 = scalar_lea.vmem %s1, 8
    %507 = vst.msk [vmem:[%s506] sm:$0xff] %vm505, %v504
    %s508 = scalar_lea.vmem [#allocation0], 322
    %v509 = vld [vmem:[%s508] ss:$8 sm:$0xf]
    %s510 = scalar_lea.vmem [#allocation0], 322
    %v511 = vld [vmem:[%s510] ss:$8 sm:$0xf0]
    %vm512 = vcmask 1047556
    %v513 = vsel %vm512, %v511, %v509
    %514 = vrot.lane.b32.xlu0 %v513, 32
    %v515 = vpop.permute.xlu0 %514
    %vm516 = vcmask 392448
    %s517 = scalar_lea.vmem %s1, 40
    %518 = vst.msk [vmem:[%s517] sm:$0xff] %vm516, %v515
    %s519 = scalar_lea.vmem [#allocation0], 130
    %v520 = vld [vmem:[%s519] ss:$8 sm:$0xf]
    %s521 = scalar_lea.vmem [#allocation0], 130
    %v522 = vld [vmem:[%s521] ss:$8 sm:$0xf0]
    %vm523 = vcmask 1047556
    %v524 = vsel %vm523, %v522, %v520
    %525 = vrot.lane.b32.xlu0 %v524, 32
    %v526 = vpop.permute.xlu0 %525
    %vm527 = vcmask 392448
    %s528 = scalar_lea.vmem %s1, 16
    %529 = vst.msk [vmem:[%s528] sm:$0xff] %vm527, %v526
    %s530 = scalar_lea.vmem [#allocation0], 386
    %v531 = vld [vmem:[%s530] ss:$8 sm:$0xf]
    %s532 = scalar_lea.vmem [#allocation0], 386
    %v533 = vld [vmem:[%s532] ss:$8 sm:$0xf0]
    %vm534 = vcmask 1047556
    %v535 = vsel %vm534, %v533, %v531
    %536 = vrot.lane.b32.xlu0 %v535, 32
    %v537 = vpop.permute.xlu0 %536
    %vm538 = vcmask 392448
    %s539 = scalar_lea.vmem %s1, 48
    %540 = vst.msk [vmem:[%s539] sm:$0xff] %vm538, %v537
    %s541 = scalar_lea.vmem [#allocation0], 194
    %v542 = vld [vmem:[%s541] ss:$8 sm:$0xf]
    %s543 = scalar_lea.vmem [#allocation0], 194
    %v544 = vld [vmem:[%s543] ss:$8 sm:$0xf0]
    %vm545 = vcmask 1047556
    %v546 = vsel %vm545, %v544, %v542
    %547 = vrot.lane.b32.xlu0 %v546, 32
    %v548 = vpop.permute.xlu0 %547
    %vm549 = vcmask 392448
    %s550 = scalar_lea.vmem %s1, 24
    %551 = vst.msk [vmem:[%s550] sm:$0xff] %vm549, %v548
    %s552 = scalar_lea.vmem [#allocation0], 450
    %v553 = vld [vmem:[%s552] ss:$8 sm:$0xf]
    %s554 = scalar_lea.vmem [#allocation0], 450
    %v555 = vld [vmem:[%s554] ss:$8 sm:$0xf0]
    %vm556 = vcmask 1047556
    %v557 = vsel %vm556, %v555, %v553
    %558 = vrot.lane.b32.xlu0 %v557, 32
    %v559 = vpop.permute.xlu0 %558
    %vm560 = vcmask 392448
    %s561 = scalar_lea.vmem %s1, 56
    %562 = vst.msk [vmem:[%s561] sm:$0xff] %vm560, %v559
    %s563 = scalar_lea.vmem [#allocation0], 1
    %v564 = vld [vmem:[%s563] ss:$8 sm:$0xf]
    %s565 = scalar_lea.vmem [#allocation0], 1
    %v566 = vld [vmem:[%s565] ss:$8 sm:$0xf0]
    %vm567 = vcmask 1047556
    %v568 = vsel %vm567, %v566, %v564
    %569 = vrot.lane.b32.xlu0 %v568, 16
    %v570 = vpop.permute.xlu0 %569
    %vm571 = vcmask 261248
    %572 = vst.msk [vmem:[%s1] sm:$0xff] %vm571, %v570
    %s573 = scalar_lea.vmem [#allocation0], 257
    %v574 = vld [vmem:[%s573] ss:$8 sm:$0xf]
    %s575 = scalar_lea.vmem [#allocation0], 257
    %v576 = vld [vmem:[%s575] ss:$8 sm:$0xf0]
    %vm577 = vcmask 1047556
    %v578 = vsel %vm577, %v576, %v574
    %579 = vrot.lane.b32.xlu0 %v578, 16
    %v580 = vpop.permute.xlu0 %579
    %vm581 = vcmask 261248
    %s582 = scalar_lea.vmem %s1, 32
    %583 = vst.msk [vmem:[%s582] sm:$0xff] %vm581, %v580
    %s584 = scalar_lea.vmem [#allocation0], 65
    %v585 = vld [vmem:[%s584] ss:$8 sm:$0xf]
    %s586 = scalar_lea.vmem [#allocation0], 65
    %v587 = vld [vmem:[%s586] ss:$8 sm:$0xf0]
    %vm588 = vcmask 1047556
    %v589 = vsel %vm588, %v587, %v585
    %590 = vrot.lane.b32.xlu0 %v589, 16
    %v591 = vpop.permute.xlu0 %590
    %vm592 = vcmask 261248
    %s593 = scalar_lea.vmem %s1, 8
    %594 = vst.msk [vmem:[%s593] sm:$0xff] %vm592, %v591
    %s595 = scalar_lea.vmem [#allocation0], 321
    %v596 = vld [vmem:[%s595] ss:$8 sm:$0xf]
    %s597 = scalar_lea.vmem [#allocation0], 321
    %v598 = vld [vmem:[%s597] ss:$8 sm:$0xf0]
    %vm599 = vcmask 1047556
    %v600 = vsel %vm599, %v598, %v596
    %601 = vrot.lane.b32.xlu0 %v600, 16
    %v602 = vpop.permute.xlu0 %601
    %vm603 = vcmask 261248
    %s604 = scalar_lea.vmem %s1, 40
    %605 = vst.msk [vmem:[%s604] sm:$0xff] %vm603, %v602
    %s606 = scalar_lea.vmem [#allocation0], 129
    %v607 = vld [vmem:[%s606] ss:$8 sm:$0xf]
    %s608 = scalar_lea.vmem [#allocation0], 129
    %v609 = vld [vmem:[%s608] ss:$8 sm:$0xf0]
    %vm610 = vcmask 1047556
    %v611 = vsel %vm610, %v609, %v607
    %612 = vrot.lane.b32.xlu0 %v611, 16
    %v613 = vpop.permute.xlu0 %612
    %vm614 = vcmask 261248
    %s615 = scalar_lea.vmem %s1, 16
    %616 = vst.msk [vmem:[%s615] sm:$0xff] %vm614, %v613
    %s617 = scalar_lea.vmem [#allocation0], 385
    %v618 = vld [vmem:[%s617] ss:$8 sm:$0xf]
    %s619 = scalar_lea.vmem [#allocation0], 385
    %v620 = vld [vmem:[%s619] ss:$8 sm:$0xf0]
    %vm621 = vcmask 1047556
    %v622 = vsel %vm621, %v620, %v618
    %623 = vrot.lane.b32.xlu0 %v622, 16
    %v624 = vpop.permute.xlu0 %623
    %vm625 = vcmask 261248
    %s626 = scalar_lea.vmem %s1, 48
    %627 = vst.msk [vmem:[%s626] sm:$0xff] %vm625, %v624
    %s628 = scalar_lea.vmem [#allocation0], 193
    %v629 = vld [vmem:[%s628] ss:$8 sm:$0xf]
    %s630 = scalar_lea.vmem [#allocation0], 193
    %v631 = vld [vmem:[%s630] ss:$8 sm:$0xf0]
    %vm632 = vcmask 1047556
    %v633 = vsel %vm632, %v631, %v629
    %634 = vrot.lane.b32.xlu0 %v633, 16
    %v635 = vpop.permute.xlu0 %634
    %vm636 = vcmask 261248
    %s637 = scalar_lea.vmem %s1, 24
    %638 = vst.msk [vmem:[%s637] sm:$0xff] %vm636, %v635
    %s639 = scalar_lea.vmem [#allocation0], 449
    %v640 = vld [vmem:[%s639] ss:$8 sm:$0xf]
    %s641 = scalar_lea.vmem [#allocation0], 449
    %v642 = vld [vmem:[%s641] ss:$8 sm:$0xf0]
    %vm643 = vcmask 1047556
    %v644 = vsel %vm643, %v642, %v640
    %645 = vrot.lane.b32.xlu0 %v644, 16
    %v646 = vpop.permute.xlu0 %645
    %vm647 = vcmask 261248
    %s648 = scalar_lea.vmem %s1, 56
    %649 = vst.msk [vmem:[%s648] sm:$0xff] %vm647, %v646

// kernel: eq.22
$region0: #{eq.22}
  %s0 = inlined_call_operand.vmem [shape: s32[4,16], index: 0, kind: input, shape index: {}]
  %s1 = inlined_call_operand.vmem [shape: s32[64], index: 1, kind: output, shape index: {}]
  $region1: #{eq.22} parent=0
    #allocation0 [shape = 'u8[4096]{0}', space=vmem, size = 0x1000, scoped, tag = 'scoped mem for output reshape']
    #allocation1 [shape = 'u8[4096]{0}', space=vmem, size = 0x1000, scoped, tag = 'scoped mem for input reshape']
    %s3 = sshllo.u32 0, 4
    %v4 = vld [vmem:[%s0] sm:%s3]
    %5 = vst [vmem:[#allocation1] sm:%s3] %v4
    %v6 = vld [vmem:[#allocation1] sm:$0x1]
    %vm7 = vcmask 130048
    %8 = vst.msk [vmem:[#allocation0] sm:$0x1] %vm7, %v6
    %s9 = scalar_lea.vmem [#allocation1], 3
    %v10 = vld [vmem:[%s9] sm:$0x1]
    %11 = vrot.lane.b32.xlu0 %v10, 48
    %v12 = vpop.permute.xlu0 %11
    %vm13 = vcmask 523648
    %14 = vst.msk [vmem:[#allocation0] sm:$0x1] %vm13, %v12
    %s15 = scalar_lea.vmem [#allocation1], 2
    %v16 = vld [vmem:[%s15] sm:$0x1]
    %17 = vrot.lane.b32.xlu0 %v16, 32
    %v18 = vpop.permute.xlu0 %17
    %vm19 = vcmask 392448
    %20 = vst.msk [vmem:[#allocation0] sm:$0x1] %vm19, %v18
    %s21 = scalar_lea.vmem [#allocation1], 1
    %v22 = vld [vmem:[%s21] sm:$0x1]
    %23 = vrot.lane.b32.xlu0 %v22, 16
    %v24 = vpop.permute.xlu0 %23
    %vm25 = vcmask 261248
    %26 = vst.msk [vmem:[#allocation0] sm:$0x1] %vm25, %v24
    %s28 = sshllo.u32 0, 1
    %v30 = vld [vmem:[#allocation0] sm:%s28]
    %s31 = sshllo.u32 0, 1
    %32 = vst [vmem:[%s1] sm:%s31] %v30

// kernel: fancy_encoder_forward.1
$region0: #{fancy_encoder_forward.1}
  #allocation0 [shape = 'u32[]', space=smem, size = 0x4, offset = 0x4, fixed_abs, tag = 'smem constant byte address 0x4 - core index']
  #allocation1 [shape = 'u32[144,128]{1,0:T(1,128)}', space=vmem, size = 0x12000, scoped, tag = 'internal scratch']
  %s0 = inlined_call_operand.vmem [shape: f32[16,32], index: 0, kind: input, shape index: {}]
  %s1 = inlined_call_operand.vmem [shape: f32[16,32], index: 1, kind: input, shape index: {}]
  %s2 = inlined_call_operand.vmem [shape: f32[64,64], index: 2, kind: input, shape index: {}]
  %s3 = inlined_call_operand.vmem [shape: bf16[2,32,96], index: 3, kind: input, shape index: {}]
  %s4 = inlined_call_operand.vmem [shape: bf16[2,32,32], index: 4, kind: input, shape index: {}]
  %s5 = inlined_call_operand.vmem [shape: bf16[2,32,64], index: 5, kind: input, shape index: {}]
  %s6 = inlined_call_operand.vmem [shape: bf16[2,64,32], index: 6, kind: input, shape index: {}]
  %s7 = inlined_call_operand.vmem [shape: f32[2,8,128], index: 7, kind: input, shape index: {}]
  %s8 = inlined_call_operand.vmem [shape: f32[2,32], index: 8, kind: input, shape index: {}]
  %s9 = inlined_call_operand.hbm [shape: f32[16,32], index: 9, kind: output, shape index: {}]
  %s10 = sld [smem:[#allocation0]]
  $region46: #{fancy_encoder_forward.1} parent=0
    _
  %s12 = ssub.s32 1, %s10
  %s13 = scalar_select 0, %s12, %s10
  $region1: #{fancy_encoder_forward.1} parent=0
    #allocation2 [shape = 'u8[8192]{0}', space=vmem, size = 0x2000, scoped, tag = 'output window, operand 0, single buffered']
    #allocation3 [shape = 's32[1]{0}', space=sflag, size = 0x4, scoped, tag = 'scoped memory for fancy_encoder_forward.1']
    %14 = vsyncpa [#allocation3], 0
    // Predicated region
    $region2: #{fancy_encoder_forward.1} parent=1 // pred_check
      _
    $region3: #{fancy_encoder_forward.1} parent=1 // pred_check_branch
      %16 = sbr.rel (0) target = $region5
    $region4: #{fancy_encoder_forward.1} parent=1 // pred_region
      _
    $region5: #{fancy_encoder_forward.1} parent=1 // pred_fallthru
      _
    // Predicated region
    $region6: #{fancy_encoder_forward.1} parent=1 // pred_check
      _
    $region7: #{fancy_encoder_forward.1} parent=1 // pred_check_branch
      %18 = sbr.rel (0) target = $region9
    $region8: #{fancy_encoder_forward.1} parent=1 // pred_region
      _
    $region9: #{fancy_encoder_forward.1} parent=1 // pred_fallthru
      _
    // Predicated region
    $region10: #{fancy_encoder_forward.1} parent=1 // pred_check
      _
    $region11: #{fancy_encoder_forward.1} parent=1 // pred_check_branch
      %20 = sbr.rel (0) target = $region13
    $region12: #{fancy_encoder_forward.1} parent=1 // pred_region
      _
    $region13: #{fancy_encoder_forward.1} parent=1 // pred_fallthru
      _
    // Predicated region
    $region14: #{fancy_encoder_forward.1} parent=1 // pred_check
      _
    $region15: #{fancy_encoder_forward.1} parent=1 // pred_check_branch
      %22 = sbr.rel (0) target = $region17
    $region16: #{fancy_encoder_forward.1} parent=1 // pred_region
      _
    $region17: #{fancy_encoder_forward.1} parent=1 // pred_fallthru
      _
    // Predicated region
    $region18: #{fancy_encoder_forward.1} parent=1 // pred_check
      _
    $region19: #{fancy_encoder_forward.1} parent=1 // pred_check_branch
      %24 = sbr.rel (0) target = $region21
    $region20: #{fancy_encoder_forward.1} parent=1 // pred_region
      _
    $region21: #{fancy_encoder_forward.1} parent=1 // pred_fallthru
      _
    // Predicated region
    $region22: #{fancy_encoder_forward.1} parent=1 // pred_check
      _
    $region23: #{fancy_encoder_forward.1} parent=1 // pred_check_branch
      %26 = sbr.rel (0) target = $region25
    $region24: #{fancy_encoder_forward.1} parent=1 // pred_region
      _
    $region25: #{fancy_encoder_forward.1} parent=1 // pred_fallthru
      _
    // Predicated region
    $region26: #{fancy_encoder_forward.1} parent=1 // pred_check
      _
    $region27: #{fancy_encoder_forward.1} parent=1 // pred_check_branch
      %28 = sbr.rel (0) target = $region29
    $region28: #{fancy_encoder_forward.1} parent=1 // pred_region
      _
    $region29: #{fancy_encoder_forward.1} parent=1 // pred_fallthru
      _
    // Predicated region
    $region30: #{fancy_encoder_forward.1} parent=1 // pred_check
      _
    $region31: #{fancy_encoder_forward.1} parent=1 // pred_check_branch
      %30 = sbr.rel (0) target = $region33
    $region32: #{fancy_encoder_forward.1} parent=1 // pred_region
      _
    $region33: #{fancy_encoder_forward.1} parent=1 // pred_fallthru
      _
    // Predicated region
    $region34: #{fancy_encoder_forward.1} parent=1 // pred_check
      _
    $region35: #{fancy_encoder_forward.1} parent=1 // pred_check_branch
      %32 = sbr.rel (0) target = $region37
    $region36: #{fancy_encoder_forward.1} parent=1 // pred_region
      _
    $region37: #{fancy_encoder_forward.1} parent=1 // pred_fallthru
      _
    %v34 = vld [vmem:[%s0] sm:$0xff]
    %v35 = vld [vmem:[%s0 + $0x8] sm:$0xff]
    %v36 = vld [vmem:[%s1] sm:$0xff]
    %v37 = vld [vmem:[%s1 + $0x8] sm:$0xff]
    %v38 = vadd.f32 %v34, %v36
    %v39 = vadd.f32 %v35, %v37
    %v40 = vld [vmem:[%s2] sm:$0xff]
    %v41 = vld [vmem:[%s2 + $0x8] sm:$0xff]
    %v42 = vld [vmem:[%s2 + $0x10] sm:$0xff]
    %v43 = vld [vmem:[%s2 + $0x18] sm:$0xff]
    %v44 = vld [vmem:[%s2 + $0x20] sm:$0xff]
    %v45 = vld [vmem:[%s2 + $0x28] sm:$0xff]
    %v46 = vld [vmem:[%s2 + $0x30] sm:$0xff]
    %v47 = vld [vmem:[%s2 + $0x38] sm:$0xff]
    %v48 = vld [vmem:[%s7] sm:$0xff]
    %vm49 = vcmask 261120
    %v50 = vsel %vm49, %v38, 0.0
    %51 = vadd.xlane.f32.xlu0 %v50
    %v52 = vpop.xlane.xlu0 %51
    %v53 = vsel %vm49, %v39, 0.0
    %54 = vadd.xlane.f32.xlu0 %v53
    %v55 = vpop.xlane.xlu0 %54
    %v56 = vrcp.pop 32.0
    %v57 = vmul.f32 %v52, %v56
    %v58 = vmul.f32 %v55, %v56
    %v59 = vsub.f32 %v38, %v57
    %v60 = vsub.f32 %v39, %v58
    %v61 = vmul.f32 %v59, %v59
    %v62 = vmul.f32 %v60, %v60
    %v63 = vsel %vm49, %v61, 0.0
    %64 = vadd.xlane.f32.xlu0 %v63
    %v65 = vpop.xlane.xlu0 %64
    %v66 = vsel %vm49, %v62, 0.0
    %67 = vadd.xlane.f32.xlu0 %v66
    %v68 = vpop.xlane.xlu0 %67
    %v69 = vmul.f32 %v65, %v56
    %v70 = vmul.f32 %v68, %v56
    %v71 = vadd.f32 %v69, 1e-05
    %v72 = vadd.f32 %v70, 1e-05
    %v73 = vrsqrt.pop %v71
    %v74 = vrsqrt.pop %v72
    %v75 = vmul.f32 %v59, %v73
    %v76 = vmul.f32 %v60, %v74
    %v77 = vlaneseq
    %v78 = vshrl.u32 %v77, 7
    %v79 = vsub.s32 0, %v78
    %v80 = vrot.slane %v48, %v79
    %v81 = vmul.f32 %v75, %v80
    %v82 = vmul.f32 %v76, %v80
    %v83 = vlaneseq
    %v84 = vshrl.u32 %v83, 7
    %v85 = vsub.s32 1, %v84
    %v86 = vrot.slane %v48, %v85
    %v87 = vadd.f32 %v81, %v86
    %v88 = vadd.f32 %v82, %v86
    %v89 = vpack.c.bf16 %v88, %v87
    %v90 = vld [vmem:[%s3] sm:$0xf]
    %v91 = vld [vmem:[%s3 + $0x4] sm:$0xf]
    %v92 = vld [vmem:[%s3 + $0x8] sm:$0xf]
    %v93 = vld [vmem:[%s3 + $0xc] sm:$0xf]
    %v94 = vlaneseq
    %v95 = vshrl.u32 %v94, 7
    %v96 = vsub.s32 4, %v95
    %v97 = vrot.slane %v48, %v96
    %v102 = vunpack.c.l.b16 %v90
    %v103 = vunpack.c.l.b16 %v91
    %v104 = vunpack.c.l.b16 %v92
    %v105 = vunpack.c.l.b16 %v93
    %v106 = vpack.c.b16 %v103, %v102
    %v107 = vpack.c.b16 %v105, %v104
    %v111 = vsel %vm49, %v89, 0
    %113 = vmatprep.subr.bf16.mxu0 0
    %114 = vmatpush1.bf16.msra.mxu0 %v106
    %115 = vmatprep.subr.bf16.mxu0 0
    %116 = vmatpush1.bf16.msra.mxu0 %v107
    %117 = vmatprep.subr.bf16.mxu0 0
    %118 = vmatpush1.bf16.msra.mxu0 0
    %119 = vmatprep.subr.bf16.mxu0 0
    %120 = vmatpush1.bf16.msra.mxu0 0
    %121 = vmatprep.subr.bf16.mxu0 0
    %122 = vmatpush1.bf16.msra.mxu0 0
    %123 = vmatprep.subr.bf16.mxu0 0
    %124 = vmatpush1.bf16.msra.mxu0 0
    %125 = vmatprep.subr.bf16.mxu0 0
    %126 = vmatpush1.bf16.msra.mxu0 0
    %127 = vmatprep.subr.bf16.mxu0 0
    %128 = vmatpush1.bf16.msra.mxu0 0
    %129 = vmatprep.subr.bf16.mxu0 0
    %130 = vmatpush1.bf16.msra.mxu0 0
    %131 = vmatprep.subr.bf16.mxu0 0
    %132 = vmatpush1.bf16.msra.mxu0 0
    %133 = vmatprep.subr.bf16.mxu0 0
    %134 = vmatpush1.bf16.msra.mxu0 0
    %135 = vmatprep.subr.bf16.mxu0 0
    %136 = vmatpush1.bf16.msra.mxu0 0
    %137 = vmatprep.subr.bf16.mxu0 0
    %138 = vmatpush1.bf16.msra.mxu0 0
    %139 = vmatprep.subr.bf16.mxu0 0
    %140 = vmatpush1.bf16.msra.mxu0 0
    %141 = vmatprep.subr.bf16.mxu0 0
    %142 = vmatpush1.bf16.msra.mxu0 0
    %143 = vmatprep.subr.bf16.mxu0 0
    %144 = vmatpush1.bf16.msra.mxu0 0
    %145 = vmatprep.mubr.bf16.mxu0 0
    %146 = vmatmul.mubr.bf16.gmra.mrb[0].mxu0 %v111
    %v147 = vpop.f32.mrb[0].mxu0
    %v148 = vadd.f32 %v97, %v147
    %v149 = vpop.f32.mrb[0].mxu0
    %v150 = vpop.f32.mrb[0].mxu0
    %v151 = vadd.f32 %v97, %v150
    %v152 = vpop.f32.mrb[0].mxu0
    %153 = vdwg.mxu0
    %156 = vrot.lane.b32.xlu0 %v148, 120
    %v157 = vpop.permute.xlu0 %156
    %158 = vrot.lane.b32.xlu0 %v151, 120
    %v159 = vpop.permute.xlu0 %158
    %160 = vrot.lane.b32.xlu0 %v148, 112
    %v161 = vpop.permute.xlu0 %160
    %162 = vrot.lane.b32.xlu0 %v151, 112
    %v163 = vpop.permute.xlu0 %162
    %164 = vrot.lane.b32.xlu0 %v148, 104
    %v165 = vpop.permute.xlu0 %164
    %166 = vrot.lane.b32.xlu0 %v151, 104
    %v167 = vpop.permute.xlu0 %166
    %168 = vrot.lane.b32.xlu0 %v148, 96
    %v169 = vpop.permute.xlu0 %168
    %170 = vrot.lane.b32.xlu0 %v151, 96
    %v171 = vpop.permute.xlu0 %170
    %172 = vrot.lane.b32.xlu0 %v157, 96
    %v173 = vpop.permute.xlu0 %172
    %174 = vrot.lane.b32.xlu0 %v159, 96
    %v175 = vpop.permute.xlu0 %174
    %176 = vrot.lane.b32.xlu0 %v161, 96
    %v177 = vpop.permute.xlu0 %176
    %178 = vrot.lane.b32.xlu0 %v163, 96
    %v179 = vpop.permute.xlu0 %178
    %180 = vrot.lane.b32.xlu0 %v165, 96
    %v181 = vpop.permute.xlu0 %180
    %182 = vrot.lane.b32.xlu0 %v167, 96
    %v183 = vpop.permute.xlu0 %182
    %vm184 = vcmask 64512
    %v185 = vsel %vm184, %v148, 0
    %v187 = vsel %vm184, %v151, 0
    %v189 = vsel %vm184, %v157, 0
    %v191 = vsel %vm184, %v159, 0
    %v193 = vsel %vm184, %v161, 0
    %v195 = vsel %vm184, %v163, 0
    %v197 = vsel %vm184, %v165, 0
    %v199 = vsel %vm184, %v167, 0
    %v201 = vsel %vm184, %v169, 0
    %v203 = vsel %vm184, %v171, 0
    %v205 = vsel %vm184, %v173, 0
    %v207 = vsel %vm184, %v175, 0
    %v209 = vsel %vm184, %v177, 0
    %v211 = vsel %vm184, %v179, 0
    %v213 = vsel %vm184, %v181, 0
    %v215 = vsel %vm184, %v183, 0
    %217 = vmatprep.subr.mxu0 0.0
    %218 = vmatpush1.xpose.msra.mxu0 %v201
    %219 = vmatprep.subr.mxu0 0.0
    %220 = vmatpush1.xpose.msra.mxu0 %v203
    %221 = vmatprep.subr.mxu0 0.0
    %222 = vmatpush1.xpose.msra.mxu0 %v205
    %223 = vmatprep.subr.mxu0 0.0
    %224 = vmatpush1.xpose.msra.mxu0 %v207
    %225 = vmatprep.subr.mxu0 0.0
    %226 = vmatpush1.xpose.msra.mxu0 %v209
    %227 = vmatprep.subr.mxu0 0.0
    %228 = vmatpush1.xpose.msra.mxu0 %v211
    %229 = vmatprep.subr.mxu0 0.0
    %230 = vmatpush1.xpose.msra.mxu0 %v213
    %231 = vmatprep.subr.mxu0 0.0
    %232 = vmatpush1.xpose.msra.mxu0 %v215
    %233 = vmatprep.subr.mxu0 0.0
    %234 = vmatpush1.xpose.msra.mxu0 0.0
    %235 = vmatprep.subr.mxu0 0.0
    %236 = vmatpush1.xpose.msra.mxu0 0.0
    %237 = vmatprep.subr.mxu0 0.0
    %238 = vmatpush1.xpose.msra.mxu0 0.0
    %239 = vmatprep.subr.mxu0 0.0
    %240 = vmatpush1.xpose.msra.mxu0 0.0
    %241 = vmatprep.subr.mxu0 0.0
    %242 = vmatpush1.xpose.msra.mxu0 0.0
    %243 = vmatprep.subr.mxu0 0.0
    %244 = vmatpush1.xpose.msra.mxu0 0.0
    %245 = vmatprep.subr.mxu0 0.0
    %246 = vmatpush1.xpose.msra.mxu0 0.0
    %247 = vmatprep.subr.mxu0 0.0
    %248 = vmatpush1.xpose.msra.mxu0 0.0
    %249 = vmatprep.subr.mxu0 0.0
    %250 = vmatpush1.xpose.msra.mxu0 0.0
    %251 = vmatprep.subr.mxu0 0.0
    %252 = vmatpush1.xpose.msra.mxu0 0.0
    %253 = vmatprep.subr.mxu0 0.0
    %254 = vmatpush1.xpose.msra.mxu0 0.0
    %255 = vmatprep.subr.mxu0 0.0
    %256 = vmatpush1.xpose.msra.mxu0 0.0
    %257 = vmatprep.subr.mxu0 0.0
    %258 = vmatpush1.xpose.msra.mxu0 0.0
    %259 = vmatprep.subr.mxu0 0.0
    %260 = vmatpush1.xpose.msra.mxu0 0.0
    %261 = vmatprep.subr.mxu0 0.0
    %262 = vmatpush1.xpose.msra.mxu0 0.0
    %263 = vmatprep.subr.mxu0 0.0
    %264 = vmatpush1.xpose.msra.mxu0 0.0
    %265 = vmatprep.subr.mxu0 0.0
    %266 = vmatpush1.xpose.msra.mxu0 0.0
    %267 = vmatprep.subr.mxu0 0.0
    %268 = vmatpush1.xpose.msra.mxu0 0.0
    %269 = vmatprep.subr.mxu0 0.0
    %270 = vmatpush1.xpose.msra.mxu0 0.0
    %271 = vmatprep.subr.mxu0 0.0
    %272 = vmatpush1.xpose.msra.mxu0 0.0
    %273 = vmatprep.subr.mxu0 0.0
    %274 = vmatpush1.xpose.msra.mxu0 0.0
    %275 = vmatprep.subr.mxu0 0.0
    %276 = vmatpush1.xpose.msra.mxu0 0.0
    %277 = vmatprep.subr.mxu0 0.0
    %278 = vmatpush1.xpose.msra.mxu0 0.0
    %279 = vmatprep.subr.mxu0 0.0
    %280 = vmatpush1.xpose.msra.mxu0 0.0
    %281 = vmatprep.mubr.f32.mxu0 0.0
    %282 = vmatmul.mubr.f32.gmra.mrb[0].mxu0 %v185
    %v283 = vpop.f32.mrb[0].mxu0
    %v284 = vadd.f32 0.0, %v283
    %v285 = vpop.f32.mrb[0].mxu0
    %286 = vmatprep.mubr.f32.mxu0 0.0
    %287 = vmatmul.mubr.f32.gmra.mrb[0].mxu0 %v187
    %v288 = vpop.f32.mrb[0].mxu0
    %v289 = vadd.f32 0.0, %v288
    %v290 = vpop.f32.mrb[0].mxu0
    %291 = vmatprep.mubr.f32.mxu0 0.0
    %292 = vmatmul.mubr.f32.gmra.mrb[0].mxu0 %v189
    %v293 = vpop.f32.mrb[0].mxu0
    %v294 = vadd.f32 0.0, %v293
    %v295 = vpop.f32.mrb[0].mxu0
    %296 = vmatprep.mubr.f32.mxu0 0.0
    %297 = vmatmul.mubr.f32.gmra.mrb[0].mxu0 %v191
    %v298 = vpop.f32.mrb[0].mxu0
    %v299 = vadd.f32 0.0, %v298
    %v300 = vpop.f32.mrb[0].mxu0
    %301 = vmatprep.mubr.f32.mxu0 0.0
    %302 = vmatmul.mubr.f32.gmra.mrb[0].mxu0 %v193
    %v303 = vpop.f32.mrb[0].mxu0
    %v304 = vadd.f32 0.0, %v303
    %v305 = vpop.f32.mrb[0].mxu0
    %306 = vmatprep.mubr.f32.mxu0 0.0
    %307 = vmatmul.mubr.f32.gmra.mrb[0].mxu0 %v195
    %v308 = vpop.f32.mrb[0].mxu0
    %v309 = vadd.f32 0.0, %v308
    %v310 = vpop.f32.mrb[0].mxu0
    %311 = vmatprep.mubr.f32.mxu0 0.0
    %312 = vmatmul.mubr.f32.gmra.mrb[0].mxu0 %v197
    %v313 = vpop.f32.mrb[0].mxu0
    %v314 = vadd.f32 0.0, %v313
    %v315 = vpop.f32.mrb[0].mxu0
    %316 = vmatprep.mubr.f32.mxu0 0.0
    %317 = vmatmul.mubr.f32.gmra.mrb[0].mxu0 %v199
    %v318 = vpop.f32.mrb[0].mxu0
    %v319 = vadd.f32 0.0, %v318
    %v320 = vpop.f32.mrb[0].mxu0
    %321 = vdwg.mxu0
    %v322 = vmul.f32 %v284, 0.35355338
    %v323 = vmul.f32 %v289, 0.35355338
    %v324 = vmul.f32 %v294, 0.35355338
    %v325 = vmul.f32 %v299, 0.35355338
    %v326 = vmul.f32 %v304, 0.35355338
    %v327 = vmul.f32 %v309, 0.35355338
    %v328 = vmul.f32 %v314, 0.35355338
    %v329 = vmul.f32 %v319, 0.35355338
    %v330 = vadd.f32 %v322, %v40
    %v331 = vadd.f32 %v323, %v41
    %v332 = vadd.f32 %v324, %v42
    %v333 = vadd.f32 %v325, %v43
    %v334 = vadd.f32 %v326, %v44
    %v335 = vadd.f32 %v327, %v45
    %v336 = vadd.f32 %v328, %v46
    %v337 = vadd.f32 %v329, %v47
    %vm338 = vcmask 523264
    %v339 = vsel %vm338, %v330, -inf
    %340 = vmax.xlane.f32.xlu0 %v339
    %v341 = vpop.xlane.xlu0 %340
    %v342 = vsel %vm338, %v331, -inf
    %343 = vmax.xlane.f32.xlu0 %v342
    %v344 = vpop.xlane.xlu0 %343
    %v345 = vsel %vm338, %v332, -inf
    %346 = vmax.xlane.f32.xlu0 %v345
    %v347 = vpop.xlane.xlu0 %346
    %v348 = vsel %vm338, %v333, -inf
    %349 = vmax.xlane.f32.xlu0 %v348
    %v350 = vpop.xlane.xlu0 %349
    %v351 = vsel %vm338, %v334, -inf
    %352 = vmax.xlane.f32.xlu0 %v351
    %v353 = vpop.xlane.xlu0 %352
    %v354 = vsel %vm338, %v335, -inf
    %355 = vmax.xlane.f32.xlu0 %v354
    %v356 = vpop.xlane.xlu0 %355
    %v357 = vsel %vm338, %v336, -inf
    %358 = vmax.xlane.f32.xlu0 %v357
    %v359 = vpop.xlane.xlu0 %358
    %v360 = vsel %vm338, %v337, -inf
    %361 = vmax.xlane.f32.xlu0 %v360
    %v362 = vpop.xlane.xlu0 %361
    %v363 = vsub.f32 %v330, %v341
    %v364 = vsub.f32 %v331, %v344
    %v365 = vsub.f32 %v332, %v347
    %v366 = vsub.f32 %v333, %v350
    %v367 = vsub.f32 %v334, %v353
    %v368 = vsub.f32 %v335, %v356
    %v369 = vsub.f32 %v336, %v359
    %v370 = vsub.f32 %v337, %v362
    %v371 = vmul.f32 %v363, 1.442695
    %v372 = vpow.pop %v371
    %v373 = vmul.f32 %v364, 1.442695
    %v374 = vpow.pop %v373
    %v375 = vmul.f32 %v365, 1.442695
    %v376 = vpow.pop %v375
    %v377 = vmul.f32 %v366, 1.442695
    %v378 = vpow.pop %v377
    %v379 = vmul.f32 %v367, 1.442695
    %v380 = vpow.pop %v379
    %v381 = vmul.f32 %v368, 1.442695
    %v382 = vpow.pop %v381
    %v383 = vmul.f32 %v369, 1.442695
    %v384 = vpow.pop %v383
    %v385 = vmul.f32 %v370, 1.442695
    %v386 = vpow.pop %v385
    %v387 = vsel %vm338, %v372, 0.0
    %388 = vadd.xlane.f32.xlu0 %v387
    %v389 = vpop.xlane.xlu0 %388
    %v390 = vsel %vm338, %v374, 0.0
    %391 = vadd.xlane.f32.xlu0 %v390
    %v392 = vpop.xlane.xlu0 %391
    %v393 = vsel %vm338, %v376, 0.0
    %394 = vadd.xlane.f32.xlu0 %v393
    %v395 = vpop.xlane.xlu0 %394
    %v396 = vsel %vm338, %v378, 0.0
    %397 = vadd.xlane.f32.xlu0 %v396
    %v398 = vpop.xlane.xlu0 %397
    %v399 = vsel %vm338, %v380, 0.0
    %400 = vadd.xlane.f32.xlu0 %v399
    %v401 = vpop.xlane.xlu0 %400
    %v402 = vsel %vm338, %v382, 0.0
    %403 = vadd.xlane.f32.xlu0 %v402
    %v404 = vpop.xlane.xlu0 %403
    %v405 = vsel %vm338, %v384, 0.0
    %406 = vadd.xlane.f32.xlu0 %v405
    %v407 = vpop.xlane.xlu0 %406
    %v408 = vsel %vm338, %v386, 0.0
    %409 = vadd.xlane.f32.xlu0 %v408
    %v410 = vpop.xlane.xlu0 %409
    %v411 = vrcp.pop %v389
    %v412 = vrcp.pop %v392
    %v413 = vrcp.pop %v395
    %v414 = vrcp.pop %v398
    %v415 = vrcp.pop %v401
    %v416 = vrcp.pop %v404
    %v417 = vrcp.pop %v407
    %v418 = vrcp.pop %v410
    %v419 = vmul.f32 %v372, %v411
    %v420 = vmul.f32 %v374, %v412
    %v421 = vmul.f32 %v376, %v413
    %v422 = vmul.f32 %v378, %v414
    %v423 = vmul.f32 %v380, %v415
    %v424 = vmul.f32 %v382, %v416
    %v425 = vmul.f32 %v384, %v417
    %v426 = vmul.f32 %v386, %v418
    %427 = vrot.lane.b32.xlu0 %v148, 64
    %v428 = vpop.permute.xlu0 %427
    %429 = vrot.lane.b32.xlu0 %v151, 64
    %v430 = vpop.permute.xlu0 %429
    %431 = vrot.lane.b32.xlu0 %v157, 64
    %v432 = vpop.permute.xlu0 %431
    %433 = vrot.lane.b32.xlu0 %v159, 64
    %v434 = vpop.permute.xlu0 %433
    %435 = vrot.lane.b32.xlu0 %v161, 64
    %v436 = vpop.permute.xlu0 %435
    %437 = vrot.lane.b32.xlu0 %v163, 64
    %v438 = vpop.permute.xlu0 %437
    %439 = vrot.lane.b32.xlu0 %v165, 64
    %v440 = vpop.permute.xlu0 %439
    %441 = vrot.lane.b32.xlu0 %v167, 64
    %v442 = vpop.permute.xlu0 %441
    %v452 = vsel %vm338, %v419, 0
    %v455 = vsel %vm338, %v420, 0
    %v458 = vsel %vm338, %v421, 0
    %v461 = vsel %vm338, %v422, 0
    %v464 = vsel %vm338, %v423, 0
    %v467 = vsel %vm338, %v424, 0
    %v470 = vsel %vm338, %v425, 0
    %v473 = vsel %vm338, %v426, 0
    %475 = vmatprep.subr.mxu0 0.0
    %476 = vmatpush1.msra.mxu0 %v428
    %477 = vmatprep.subr.mxu0 0.0
    %478 = vmatpush1.msra.mxu0 %v430
    %479 = vmatprep.subr.mxu0 0.0
    %480 = vmatpush1.msra.mxu0 %v432
    %481 = vmatprep.subr.mxu0 0.0
    %482 = vmatpush1.msra.mxu0 %v434
    %483 = vmatprep.subr.mxu0 0.0
    %484 = vmatpush1.msra.mxu0 %v436
    %485 = vmatprep.subr.mxu0 0.0
    %486 = vmatpush1.msra.mxu0 %v438
    %487 = vmatprep.subr.mxu0 0.0
    %488 = vmatpush1.msra.mxu0 %v440
    %489 = vmatprep.subr.mxu0 0.0
    %490 = vmatpush1.msra.mxu0 %v442
    %491 = vmatprep.subr.mxu0 0.0
    %492 = vmatpush1.msra.mxu0 0.0
    %493 = vmatprep.subr.mxu0 0.0
    %494 = vmatpush1.msra.mxu0 0.0
    %495 = vmatprep.subr.mxu0 0.0
    %496 = vmatpush1.msra.mxu0 0.0
    %497 = vmatprep.subr.mxu0 0.0
    %498 = vmatpush1.msra.mxu0 0.0
    %499 = vmatprep.subr.mxu0 0.0
    %500 = vmatpush1.msra.mxu0 0.0
    %501 = vmatprep.subr.mxu0 0.0
    %502 = vmatpush1.msra.mxu0 0.0
    %503 = vmatprep.subr.mxu0 0.0
    %504 = vmatpush1.msra.mxu0 0.0
    %505 = vmatprep.subr.mxu0 0.0
    %506 = vmatpush1.msra.mxu0 0.0
    %507 = vmatprep.subr.mxu0 0.0
    %508 = vmatpush1.msra.mxu0 0.0
    %509 = vmatprep.subr.mxu0 0.0
    %510 = vmatpush1.msra.mxu0 0.0
    %511 = vmatprep.subr.mxu0 0.0
    %512 = vmatpush1.msra.mxu0 0.0
    %513 = vmatprep.subr.mxu0 0.0
    %514 = vmatpush1.msra.mxu0 0.0
    %515 = vmatprep.subr.mxu0 0.0
    %516 = vmatpush1.msra.mxu0 0.0
    %517 = vmatprep.subr.mxu0 0.0
    %518 = vmatpush1.msra.mxu0 0.0
    %519 = vmatprep.subr.mxu0 0.0
    %520 = vmatpush1.msra.mxu0 0.0
    %521 = vmatprep.subr.mxu0 0.0
    %522 = vmatpush1.msra.mxu0 0.0
    %523 = vmatprep.subr.mxu0 0.0
    %524 = vmatpush1.msra.mxu0 0.0
    %525 = vmatprep.subr.mxu0 0.0
    %526 = vmatpush1.msra.mxu0 0.0
    %527 = vmatprep.subr.mxu0 0.0
    %528 = vmatpush1.msra.mxu0 0.0
    %529 = vmatprep.subr.mxu0 0.0
    %530 = vmatpush1.msra.mxu0 0.0
    %531 = vmatprep.subr.mxu0 0.0
    %532 = vmatpush1.msra.mxu0 0.0
    %533 = vmatprep.subr.mxu0 0.0
    %534 = vmatpush1.msra.mxu0 0.0
    %535 = vmatprep.subr.mxu0 0.0
    %536 = vmatpush1.msra.mxu0 0.0
    %537 = vmatprep.subr.mxu0 0.0
    %538 = vmatpush1.msra.mxu0 0.0
    %539 = vmatprep.mubr.f32.mxu0 0.0
    %540 = vmatmul.mubr.f32.gmra.mrb[0].mxu0 %v452
    %v541 = vpop.f32.mrb[0].mxu0
    %v542 = vadd.f32 0.0, %v541
    %v543 = vpop.f32.mrb[0].mxu0
    %544 = vmatprep.mubr.f32.mxu0 0.0
    %545 = vmatmul.mubr.f32.gmra.mrb[0].mxu0 %v455
    %v546 = vpop.f32.mrb[0].mxu0
    %v547 = vadd.f32 0.0, %v546
    %v548 = vpop.f32.mrb[0].mxu0
    %549 = vmatprep.mubr.f32.mxu0 0.0
    %550 = vmatmul.mubr.f32.gmra.mrb[0].mxu0 %v458
    %v551 = vpop.f32.mrb[0].mxu0
    %v552 = vadd.f32 0.0, %v551
    %v553 = vpop.f32.mrb[0].mxu0
    %554 = vmatprep.mubr.f32.mxu0 0.0
    %555 = vmatmul.mubr.f32.gmra.mrb[0].mxu0 %v461
    %v556 = vpop.f32.mrb[0].mxu0
    %v557 = vadd.f32 0.0, %v556
    %v558 = vpop.f32.mrb[0].mxu0
    %559 = vmatprep.mubr.f32.mxu0 0.0
    %560 = vmatmul.mubr.f32.gmra.mrb[0].mxu0 %v464
    %v561 = vpop.f32.mrb[0].mxu0
    %v562 = vadd.f32 0.0, %v561
    %v563 = vpop.f32.mrb[0].mxu0
    %564 = vmatprep.mubr.f32.mxu0 0.0
    %565 = vmatmul.mubr.f32.gmra.mrb[0].mxu0 %v467
    %v566 = vpop.f32.mrb[0].mxu0
    %v567 = vadd.f32 0.0, %v566
    %v568 = vpop.f32.mrb[0].mxu0
    %569 = vmatprep.mubr.f32.mxu0 0.0
    %570 = vmatmul.mubr.f32.gmra.mrb[0].mxu0 %v470
    %v571 = vpop.f32.mrb[0].mxu0
    %v572 = vadd.f32 0.0, %v571
    %v573 = vpop.f32.mrb[0].mxu0
    %574 = vmatprep.mubr.f32.mxu0 0.0
    %575 = vmatmul.mubr.f32.gmra.mrb[0].mxu0 %v473
    %v576 = vpop.f32.mrb[0].mxu0
    %v577 = vadd.f32 0.0, %v576
    %v578 = vpop.f32.mrb[0].mxu0
    %579 = vdwg.mxu0
    %582 = vrot.lane.b32.xlu0 %v552, 8
    %v583 = vpop.permute.xlu0 %582
    %584 = vrot.lane.b32.xlu0 %v557, 8
    %v585 = vpop.permute.xlu0 %584
    %590 = vrot.lane.b32.xlu0 %v562, 16
    %v591 = vpop.permute.xlu0 %590
    %592 = vrot.lane.b32.xlu0 %v567, 16
    %v593 = vpop.permute.xlu0 %592
    %598 = vrot.lane.b32.xlu0 %v572, 24
    %v599 = vpop.permute.xlu0 %598
    %600 = vrot.lane.b32.xlu0 %v577, 24
    %v601 = vpop.permute.xlu0 %600
    %v604 = vsel %vm184, %v542, %v583
    %v605 = vsel %vm184, %v547, %v585
    %vm606 = vcmask 130048
    %v607 = vsel %vm606, %v604, %v591
    %v608 = vsel %vm606, %v605, %v593
    %vm609 = vcmask 195584
    %v610 = vsel %vm609, %v607, %v599
    %v611 = vsel %vm609, %v608, %v601
    %v612 = vpack.c.bf16 %v611, %v610
    %v613 = vld [vmem:[%s4] sm:$0xf]
    %v614 = vld [vmem:[%s4 + $0x4] sm:$0xf]
    %v615 = vld [vmem:[%s4 + $0x8] sm:$0xf]
    %v616 = vld [vmem:[%s4 + $0xc] sm:$0xf]
    %v617 = vlaneseq
    %v618 = vshrl.u32 %v617, 7
    %v619 = vsub.s32 5, %v618
    %v620 = vrot.slane %v48, %v619
    %v625 = vunpack.c.l.b16 %v613
    %v626 = vunpack.c.l.b16 %v614
    %v627 = vunpack.c.l.b16 %v615
    %v628 = vunpack.c.l.b16 %v616
    %v629 = vpack.c.b16 %v626, %v625
    %v630 = vpack.c.b16 %v628, %v627
    %v634 = vsel %vm49, %v612, 0
    %636 = vmatprep.subr.bf16.mxu0 0
    %637 = vmatpush1.bf16.msra.mxu0 %v629
    %638 = vmatprep.subr.bf16.mxu0 0
    %639 = vmatpush1.bf16.msra.mxu0 %v630
    %640 = vmatprep.subr.bf16.mxu0 0
    %641 = vmatpush1.bf16.msra.mxu0 0
    %642 = vmatprep.subr.bf16.mxu0 0
    %643 = vmatpush1.bf16.msra.mxu0 0
    %644 = vmatprep.subr.bf16.mxu0 0
    %645 = vmatpush1.bf16.msra.mxu0 0
    %646 = vmatprep.subr.bf16.mxu0 0
    %647 = vmatpush1.bf16.msra.mxu0 0
    %648 = vmatprep.subr.bf16.mxu0 0
    %649 = vmatpush1.bf16.msra.mxu0 0
    %650 = vmatprep.subr.bf16.mxu0 0
    %651 = vmatpush1.bf16.msra.mxu0 0
    %652 = vmatprep.subr.bf16.mxu0 0
    %653 = vmatpush1.bf16.msra.mxu0 0
    %654 = vmatprep.subr.bf16.mxu0 0
    %655 = vmatpush1.bf16.msra.mxu0 0
    %656 = vmatprep.subr.bf16.mxu0 0
    %657 = vmatpush1.bf16.msra.mxu0 0
    %658 = vmatprep.subr.bf16.mxu0 0
    %659 = vmatpush1.bf16.msra.mxu0 0
    %660 = vmatprep.subr.bf16.mxu0 0
    %661 = vmatpush1.bf16.msra.mxu0 0
    %662 = vmatprep.subr.bf16.mxu0 0
    %663 = vmatpush1.bf16.msra.mxu0 0
    %664 = vmatprep.subr.bf16.mxu0 0
    %665 = vmatpush1.bf16.msra.mxu0 0
    %666 = vmatprep.subr.bf16.mxu0 0
    %667 = vmatpush1.bf16.msra.mxu0 0
    %668 = vmatprep.mubr.bf16.mxu0 0
    %669 = vmatmul.mubr.bf16.gmra.mrb[0].mxu0 %v634
    %v670 = vpop.f32.mrb[0].mxu0
    %v671 = vadd.f32 %v620, %v670
    %v672 = vpop.f32.mrb[0].mxu0
    %v673 = vpop.f32.mrb[0].mxu0
    %v674 = vadd.f32 %v620, %v673
    %v675 = vpop.f32.mrb[0].mxu0
    %676 = vdwg.mxu0
    %v677 = vadd.f32 %v38, %v671
    %v678 = vadd.f32 %v39, %v674
    %v679 = vsel %vm49, %v677, 0.0
    %680 = vadd.xlane.f32.xlu0 %v679
    %v681 = vpop.xlane.xlu0 %680
    %v682 = vsel %vm49, %v678, 0.0
    %683 = vadd.xlane.f32.xlu0 %v682
    %v684 = vpop.xlane.xlu0 %683
    %v685 = vmul.f32 %v681, %v56
    %v686 = vmul.f32 %v684, %v56
    %v687 = vsub.f32 %v677, %v685
    %v688 = vsub.f32 %v678, %v686
    %v689 = vmul.f32 %v687, %v687
    %v690 = vmul.f32 %v688, %v688
    %v691 = vsel %vm49, %v689, 0.0
    %692 = vadd.xlane.f32.xlu0 %v691
    %v693 = vpop.xlane.xlu0 %692
    %v694 = vsel %vm49, %v690, 0.0
    %695 = vadd.xlane.f32.xlu0 %v694
    %v696 = vpop.xlane.xlu0 %695
    %v697 = vmul.f32 %v693, %v56
    %v698 = vmul.f32 %v696, %v56
    %v699 = vadd.f32 %v697, 1e-05
    %v700 = vadd.f32 %v698, 1e-05
    %v701 = vrsqrt.pop %v699
    %v702 = vrsqrt.pop %v700
    %v703 = vmul.f32 %v687, %v701
    %v704 = vmul.f32 %v688, %v702
    %v705 = vlaneseq
    %v706 = vshrl.u32 %v705, 7
    %v707 = vsub.s32 2, %v706
    %v708 = vrot.slane %v48, %v707
    %v709 = vmul.f32 %v703, %v708
    %v710 = vmul.f32 %v704, %v708
    %v711 = vlaneseq
    %v712 = vshrl.u32 %v711, 7
    %v713 = vsub.s32 3, %v712
    %v714 = vrot.slane %v48, %v713
    %v715 = vadd.f32 %v709, %v714
    %v716 = vadd.f32 %v710, %v714
    %v717 = vpack.c.bf16 %v716, %v715
    %v718 = vld [vmem:[%s5] sm:$0xf]
    %v719 = vld [vmem:[%s5 + $0x4] sm:$0xf]
    %v720 = vld [vmem:[%s5 + $0x8] sm:$0xf]
    %v721 = vld [vmem:[%s5 + $0xc] sm:$0xf]
    %v722 = vlaneseq
    %v723 = vshrl.u32 %v722, 7
    %v724 = vsub.s32 6, %v723
    %v725 = vrot.slane %v48, %v724
    %v730 = vunpack.c.l.b16 %v718
    %v731 = vunpack.c.l.b16 %v719
    %v732 = vunpack.c.l.b16 %v720
    %v733 = vunpack.c.l.b16 %v721
    %v734 = vpack.c.b16 %v731, %v730
    %v735 = vpack.c.b16 %v733, %v732
    %v739 = vsel %vm49, %v717, 0
    %741 = vmatprep.subr.bf16.mxu0 0
    %742 = vmatpush1.bf16.msra.mxu0 %v734
    %743 = vmatprep.subr.bf16.mxu0 0
    %744 = vmatpush1.bf16.msra.mxu0 %v735
    %745 = vmatprep.subr.bf16.mxu0 0
    %746 = vmatpush1.bf16.msra.mxu0 0
    %747 = vmatprep.subr.bf16.mxu0 0
    %748 = vmatpush1.bf16.msra.mxu0 0
    %749 = vmatprep.subr.bf16.mxu0 0
    %750 = vmatpush1.bf16.msra.mxu0 0
    %751 = vmatprep.subr.bf16.mxu0 0
    %752 = vmatpush1.bf16.msra.mxu0 0
    %753 = vmatprep.subr.bf16.mxu0 0
    %754 = vmatpush1.bf16.msra.mxu0 0
    %755 = vmatprep.subr.bf16.mxu0 0
    %756 = vmatpush1.bf16.msra.mxu0 0
    %757 = vmatprep.subr.bf16.mxu0 0
    %758 = vmatpush1.bf16.msra.mxu0 0
    %759 = vmatprep.subr.bf16.mxu0 0
    %760 = vmatpush1.bf16.msra.mxu0 0
    %761 = vmatprep.subr.bf16.mxu0 0
    %762 = vmatpush1.bf16.msra.mxu0 0
    %763 = vmatprep.subr.bf16.mxu0 0
    %764 = vmatpush1.bf16.msra.mxu0 0
    %765 = vmatprep.subr.bf16.mxu0 0
    %766 = vmatpush1.bf16.msra.mxu0 0
    %767 = vmatprep.subr.bf16.mxu0 0
    %768 = vmatpush1.bf16.msra.mxu0 0
    %769 = vmatprep.subr.bf16.mxu0 0
    %770 = vmatpush1.bf16.msra.mxu0 0
    %771 = vmatprep.subr.bf16.mxu0 0
    %772 = vmatpush1.bf16.msra.mxu0 0
    %773 = vmatprep.mubr.bf16.mxu0 0
    %774 = vmatmul.mubr.bf16.gmra.mrb[0].mxu0 %v739
    %v775 = vpop.f32.mrb[0].mxu0
    %v776 = vadd.f32 %v725, %v775
    %v777 = vpop.f32.mrb[0].mxu0
    %v778 = vpop.f32.mrb[0].mxu0
    %v779 = vadd.f32 %v725, %v778
    %v780 = vpop.f32.mrb[0].mxu0
    %781 = vdwg.mxu0
    %v782 = vmul.f32 %v776, 0.5
    %v783 = vmul.f32 %v779, 0.5
    %v784 = vmul.f32 %v776, 0.70710677
    %v785 = vmul.f32 %v779, 0.70710677
    %v786 = verf.f32.pop %v784
    %v787 = verf.f32.pop %v785
    %v788 = vadd.f32 %v786, 1.0
    %v789 = vadd.f32 %v787, 1.0
    %v790 = vmul.f32 %v782, %v788
    %v791 = vmul.f32 %v783, %v789
    %v792 = vpack.c.bf16 %v791, %v790
    %v793 = vld [vmem:[%s6] sm:$0xf]
    %v794 = vld [vmem:[%s6 + $0x4] sm:$0xf]
    %v795 = vld [vmem:[%s6 + $0x8] sm:$0xf]
    %v796 = vld [vmem:[%s6 + $0xc] sm:$0xf]
    %v797 = vld [vmem:[%s6 + $0x10] sm:$0xf]
    %v798 = vld [vmem:[%s6 + $0x14] sm:$0xf]
    %v799 = vld [vmem:[%s6 + $0x18] sm:$0xf]
    %v800 = vld [vmem:[%s6 + $0x1c] sm:$0xf]
    %v801 = vlaneseq
    %v802 = vshrl.u32 %v801, 7
    %v803 = vsub.s32 7, %v802
    %v804 = vrot.slane %v48, %v803
    %v813 = vunpack.c.l.b16 %v793
    %v814 = vunpack.c.l.b16 %v794
    %v815 = vunpack.c.l.b16 %v795
    %v816 = vunpack.c.l.b16 %v796
    %v817 = vunpack.c.l.b16 %v797
    %v818 = vunpack.c.l.b16 %v798
    %v819 = vunpack.c.l.b16 %v799
    %v820 = vunpack.c.l.b16 %v800
    %v821 = vpack.c.b16 %v814, %v813
    %v822 = vpack.c.b16 %v816, %v815
    %v823 = vpack.c.b16 %v818, %v817
    %v824 = vpack.c.b16 %v820, %v819
    %v830 = vsel %vm338, %v792, 0
    %832 = vmatprep.subr.bf16.mxu0 0
    %833 = vmatpush1.bf16.msra.mxu0 %v821
    %834 = vmatprep.subr.bf16.mxu0 0
    %835 = vmatpush1.bf16.msra.mxu0 %v822
    %836 = vmatprep.subr.bf16.mxu0 0
    %837 = vmatpush1.bf16.msra.mxu0 %v823
    %838 = vmatprep.subr.bf16.mxu0 0
    %839 = vmatpush1.bf16.msra.mxu0 %v824
    %840 = vmatprep.subr.bf16.mxu0 0
    %841 = vmatpush1.bf16.msra.mxu0 0
    %842 = vmatprep.subr.bf16.mxu0 0
    %843 = vmatpush1.bf16.msra.mxu0 0
    %844 = vmatprep.subr.bf16.mxu0 0
    %845 = vmatpush1.bf16.msra.mxu0 0
    %846 = vmatprep.subr.bf16.mxu0 0
    %847 = vmatpush1.bf16.msra.mxu0 0
    %848 = vmatprep.subr.bf16.mxu0 0
    %849 = vmatpush1.bf16.msra.mxu0 0
    %850 = vmatprep.subr.bf16.mxu0 0
    %851 = vmatpush1.bf16.msra.mxu0 0
    %852 = vmatprep.subr.bf16.mxu0 0
    %853 = vmatpush1.bf16.msra.mxu0 0
    %854 = vmatprep.subr.bf16.mxu0 0
    %855 = vmatpush1.bf16.msra.mxu0 0
    %856 = vmatprep.subr.bf16.mxu0 0
    %857 = vmatpush1.bf16.msra.mxu0 0
    %858 = vmatprep.subr.bf16.mxu0 0
    %859 = vmatpush1.bf16.msra.mxu0 0
    %860 = vmatprep.subr.bf16.mxu0 0
    %861 = vmatpush1.bf16.msra.mxu0 0
    %862 = vmatprep.subr.bf16.mxu0 0
    %863 = vmatpush1.bf16.msra.mxu0 0
    %864 = vmatprep.mubr.bf16.mxu0 0
    %865 = vmatmul.mubr.bf16.gmra.mrb[0].mxu0 %v830
    %v866 = vpop.f32.mrb[0].mxu0
    %v867 = vadd.f32 %v804, %v866
    %v868 = vpop.f32.mrb[0].mxu0
    %v869 = vpop.f32.mrb[0].mxu0
    %v870 = vadd.f32 %v804, %v869
    %v871 = vpop.f32.mrb[0].mxu0
    %872 = vdwg.mxu0
    %v873 = vadd.f32 %v677, %v867
    %v874 = vadd.f32 %v678, %v870
    %s875 = scalar_lea.vmem %s7, 8
    %v876 = vld [vmem:[%s875] sm:$0xff]
    %v877 = vsel %vm49, %v873, 0.0
    %878 = vadd.xlane.f32.xlu0 %v877
    %v879 = vpop.xlane.xlu0 %878
    %v880 = vsel %vm49, %v874, 0.0
    %881 = vadd.xlane.f32.xlu0 %v880
    %v882 = vpop.xlane.xlu0 %881
    %v883 = vmul.f32 %v879, %v56
    %v884 = vmul.f32 %v882, %v56
    %v885 = vsub.f32 %v873, %v883
    %v886 = vsub.f32 %v874, %v884
    %v887 = vmul.f32 %v885, %v885
    %v888 = vmul.f32 %v886, %v886
    %v889 = vsel %vm49, %v887, 0.0
    %890 = vadd.xlane.f32.xlu0 %v889
    %v891 = vpop.xlane.xlu0 %890
    %v892 = vsel %vm49, %v888, 0.0
    %893 = vadd.xlane.f32.xlu0 %v892
    %v894 = vpop.xlane.xlu0 %893
    %v895 = vmul.f32 %v891, %v56
    %v896 = vmul.f32 %v894, %v56
    %v897 = vadd.f32 %v895, 1e-05
    %v898 = vadd.f32 %v896, 1e-05
    %v899 = vrsqrt.pop %v897
    %v900 = vrsqrt.pop %v898
    %v901 = vmul.f32 %v885, %v899
    %v902 = vmul.f32 %v886, %v900
    %v903 = vlaneseq
    %v904 = vshrl.u32 %v903, 7
    %v905 = vsub.s32 0, %v904
    %v906 = vrot.slane %v876, %v905
    %v907 = vmul.f32 %v901, %v906
    %v908 = vmul.f32 %v902, %v906
    %v909 = vlaneseq
    %v910 = vshrl.u32 %v909, 7
    %v911 = vsub.s32 1, %v910
    %v912 = vrot.slane %v876, %v911
    %v913 = vadd.f32 %v907, %v912
    %v914 = vadd.f32 %v908, %v912
    %v915 = vpack.c.bf16 %v914, %v913
    %s916 = scalar_lea.vmem %s3, 16
    %v917 = vld [vmem:[%s916] sm:$0xf]
    %v918 = vld [vmem:[%s916 + $0x4] sm:$0xf]
    %v919 = vld [vmem:[%s916 + $0x8] sm:$0xf]
    %v920 = vld [vmem:[%s916 + $0xc] sm:$0xf]
    %v921 = vlaneseq
    %v922 = vshrl.u32 %v921, 7
    %v923 = vsub.s32 4, %v922
    %v924 = vrot.slane %v876, %v923
    %v929 = vunpack.c.l.b16 %v917
    %v930 = vunpack.c.l.b16 %v918
    %v931 = vunpack.c.l.b16 %v919
    %v932 = vunpack.c.l.b16 %v920
    %v933 = vpack.c.b16 %v930, %v929
    %v934 = vpack.c.b16 %v932, %v931
    %v938 = vsel %vm49, %v915, 0
    %940 = vmatprep.subr.bf16.mxu0 0
    %941 = vmatpush1.bf16.msra.mxu0 %v933
    %942 = vmatprep.subr.bf16.mxu0 0
    %943 = vmatpush1.bf16.msra.mxu0 %v934
    %944 = vmatprep.subr.bf16.mxu0 0
    %945 = vmatpush1.bf16.msra.mxu0 0
    %946 = vmatprep.subr.bf16.mxu0 0
    %947 = vmatpush1.bf16.msra.mxu0 0
    %948 = vmatprep.subr.bf16.mxu0 0
    %949 = vmatpush1.bf16.msra.mxu0 0
    %950 = vmatprep.subr.bf16.mxu0 0
    %951 = vmatpush1.bf16.msra.mxu0 0
    %952 = vmatprep.subr.bf16.mxu0 0
    %953 = vmatpush1.bf16.msra.mxu0 0
    %954 = vmatprep.subr.bf16.mxu0 0
    %955 = vmatpush1.bf16.msra.mxu0 0
    %956 = vmatprep.subr.bf16.mxu0 0
    %957 = vmatpush1.bf16.msra.mxu0 0
    %958 = vmatprep.subr.bf16.mxu0 0
    %959 = vmatpush1.bf16.msra.mxu0 0
    %960 = vmatprep.subr.bf16.mxu0 0
    %961 = vmatpush1.bf16.msra.mxu0 0
    %962 = vmatprep.subr.bf16.mxu0 0
    %963 = vmatpush1.bf16.msra.mxu0 0
    %964 = vmatprep.subr.bf16.mxu0 0
    %965 = vmatpush1.bf16.msra.mxu0 0
    %966 = vmatprep.subr.bf16.mxu0 0
    %967 = vmatpush1.bf16.msra.mxu0 0
    %968 = vmatprep.subr.bf16.mxu0 0
    %969 = vmatpush1.bf16.msra.mxu0 0
    %970 = vmatprep.subr.bf16.mxu0 0
    %971 = vmatpush1.bf16.msra.mxu0 0
    %972 = vmatprep.mubr.bf16.mxu0 0
    %973 = vmatmul.mubr.bf16.gmra.mrb[0].mxu0 %v938
    %v974 = vpop.f32.mrb[0].mxu0
    %v975 = vadd.f32 %v924, %v974
    %v976 = vpop.f32.mrb[0].mxu0
    %v977 = vpop.f32.mrb[0].mxu0
    %v978 = vadd.f32 %v924, %v977
    %v979 = vpop.f32.mrb[0].mxu0
    %980 = vdwg.mxu0
    %983 = vrot.lane.b32.xlu0 %v975, 120
    %v984 = vpop.permute.xlu0 %983
    %985 = vrot.lane.b32.xlu0 %v978, 120
    %v986 = vpop.permute.xlu0 %985
    %987 = vrot.lane.b32.xlu0 %v975, 112
    %v988 = vpop.permute.xlu0 %987
    %989 = vrot.lane.b32.xlu0 %v978, 112
    %v990 = vpop.permute.xlu0 %989
    %991 = vrot.lane.b32.xlu0 %v975, 104
    %v992 = vpop.permute.xlu0 %991
    %993 = vrot.lane.b32.xlu0 %v978, 104
    %v994 = vpop.permute.xlu0 %993
    %995 = vrot.lane.b32.xlu0 %v975, 96
    %v996 = vpop.permute.xlu0 %995
    %997 = vrot.lane.b32.xlu0 %v978, 96
    %v998 = vpop.permute.xlu0 %997
    %999 = vrot.lane.b32.xlu0 %v984, 96
    %v1000 = vpop.permute.xlu0 %999
    %1001 = vrot.lane.b32.xlu0 %v986, 96
    %v1002 = vpop.permute.xlu0 %1001
    %1003 = vrot.lane.b32.xlu0 %v988, 96
    %v1004 = vpop.permute.xlu0 %1003
    %1005 = vrot.lane.b32.xlu0 %v990, 96
    %v1006 = vpop.permute.xlu0 %1005
    %1007 = vrot.lane.b32.xlu0 %v992, 96
    %v1008 = vpop.permute.xlu0 %1007
    %1009 = vrot.lane.b32.xlu0 %v994, 96
    %v1010 = vpop.permute.xlu0 %1009
    %v1011 = vsel %vm184, %v975, 0
    %v1013 = vsel %vm184, %v978, 0
    %v1015 = vsel %vm184, %v984, 0
    %v1017 = vsel %vm184, %v986, 0
    %v1019 = vsel %vm184, %v988, 0
    %v1021 = vsel %vm184, %v990, 0
    %v1023 = vsel %vm184, %v992, 0
    %v1025 = vsel %vm184, %v994, 0
    %v1027 = vsel %vm184, %v996, 0
    %v1029 = vsel %vm184, %v998, 0
    %v1031 = vsel %vm184, %v1000, 0
    %v1033 = vsel %vm184, %v1002, 0
    %v1035 = vsel %vm184, %v1004, 0
    %v1037 = vsel %vm184, %v1006, 0
    %v1039 = vsel %vm184, %v1008, 0
    %v1041 = vsel %vm184, %v1010, 0
    %1043 = vmatprep.subr.mxu0 0.0
    %1044 = vmatpush1.xpose.msra.mxu0 %v1027
    %1045 = vmatprep.subr.mxu0 0.0
    %1046 = vmatpush1.xpose.msra.mxu0 %v1029
    %1047 = vmatprep.subr.mxu0 0.0
    %1048 = vmatpush1.xpose.msra.mxu0 %v1031
    %1049 = vmatprep.subr.mxu0 0.0
    %1050 = vmatpush1.xpose.msra.mxu0 %v1033
    %1051 = vmatprep.subr.mxu0 0.0
    %1052 = vmatpush1.xpose.msra.mxu0 %v1035
    %1053 = vmatprep.subr.mxu0 0.0
    %1054 = vmatpush1.xpose.msra.mxu0 %v1037
    %1055 = vmatprep.subr.mxu0 0.0
    %1056 = vmatpush1.xpose.msra.mxu0 %v1039
    %1057 = vmatprep.subr.mxu0 0.0
    %1058 = vmatpush1.xpose.msra.mxu0 %v1041
    %1059 = vmatprep.subr.mxu0 0.0
    %1060 = vmatpush1.xpose.msra.mxu0 0.0
    %1061 = vmatprep.subr.mxu0 0.0
    %1062 = vmatpush1.xpose.msra.mxu0 0.0
    %1063 = vmatprep.subr.mxu0 0.0
    %1064 = vmatpush1.xpose.msra.mxu0 0.0
    %1065 = vmatprep.subr.mxu0 0.0
    %1066 = vmatpush1.xpose.msra.mxu0 0.0
    %1067 = vmatprep.subr.mxu0 0.0
    %1068 = vmatpush1.xpose.msra.mxu0 0.0
    %1069 = vmatprep.subr.mxu0 0.0
    %1070 = vmatpush1.xpose.msra.mxu0 0.0
    %1071 = vmatprep.subr.mxu0 0.0
    %1072 = vmatpush1.xpose.msra.mxu0 0.0
    %1073 = vmatprep.subr.mxu0 0.0
    %1074 = vmatpush1.xpose.msra.mxu0 0.0
    %1075 = vmatprep.subr.mxu0 0.0
    %1076 = vmatpush1.xpose.msra.mxu0 0.0
    %1077 = vmatprep.subr.mxu0 0.0
    %1078 = vmatpush1.xpose.msra.mxu0 0.0
    %1079 = vmatprep.subr.mxu0 0.0
    %1080 = vmatpush1.xpose.msra.mxu0 0.0
    %1081 = vmatprep.subr.mxu0 0.0
    %1082 = vmatpush1.xpose.msra.mxu0 0.0
    %1083 = vmatprep.subr.mxu0 0.0
    %1084 = vmatpush1.xpose.msra.mxu0 0.0
    %1085 = vmatprep.subr.mxu0 0.0
    %1086 = vmatpush1.xpose.msra.mxu0 0.0
    %1087 = vmatprep.subr.mxu0 0.0
    %1088 = vmatpush1.xpose.msra.mxu0 0.0
    %1089 = vmatprep.subr.mxu0 0.0
    %1090 = vmatpush1.xpose.msra.mxu0 0.0
    %1091 = vmatprep.subr.mxu0 0.0
    %1092 = vmatpush1.xpose.msra.mxu0 0.0
    %1093 = vmatprep.subr.mxu0 0.0
    %1094 = vmatpush1.xpose.msra.mxu0 0.0
    %1095 = vmatprep.subr.mxu0 0.0
    %1096 = vmatpush1.xpose.msra.mxu0 0.0
    %1097 = vmatprep.subr.mxu0 0.0
    %1098 = vmatpush1.xpose.msra.mxu0 0.0
    %1099 = vmatprep.subr.mxu0 0.0
    %1100 = vmatpush1.xpose.msra.mxu0 0.0
    %1101 = vmatprep.subr.mxu0 0.0
    %1102 = vmatpush1.xpose.msra.mxu0 0.0
    %1103 = vmatprep.subr.mxu0 0.0
    %1104 = vmatpush1.xpose.msra.mxu0 0.0
    %1105 = vmatprep.subr.mxu0 0.0
    %1106 = vmatpush1.xpose.msra.mxu0 0.0
    %1107 = vmatprep.mubr.f32.mxu0 0.0
    %1108 = vmatmul.mubr.f32.gmra.mrb[0].mxu0 %v1011
    %v1109 = vpop.f32.mrb[0].mxu0
    %v1110 = vadd.f32 0.0, %v1109
    %v1111 = vpop.f32.mrb[0].mxu0
    %1112 = vmatprep.mubr.f32.mxu0 0.0
    %1113 = vmatmul.mubr.f32.gmra.mrb[0].mxu0 %v1013
    %v1114 = vpop.f32.mrb[0].mxu0
    %v1115 = vadd.f32 0.0, %v1114
    %v1116 = vpop.f32.mrb[0].mxu0
    %1117 = vmatprep.mubr.f32.mxu0 0.0
    %1118 = vmatmul.mubr.f32.gmra.mrb[0].mxu0 %v1015
    %v1119 = vpop.f32.mrb[0].mxu0
    %v1120 = vadd.f32 0.0, %v1119
    %v1121 = vpop.f32.mrb[0].mxu0
    %1122 = vmatprep.mubr.f32.mxu0 0.0
    %1123 = vmatmul.mubr.f32.gmra.mrb[0].mxu0 %v1017
    %v1124 = vpop.f32.mrb[0].mxu0
    %v1125 = vadd.f32 0.0, %v1124
    %v1126 = vpop.f32.mrb[0].mxu0
    %1127 = vmatprep.mubr.f32.mxu0 0.0
    %1128 = vmatmul.mubr.f32.gmra.mrb[0].mxu0 %v1019
    %v1129 = vpop.f32.mrb[0].mxu0
    %v1130 = vadd.f32 0.0, %v1129
    %v1131 = vpop.f32.mrb[0].mxu0
    %1132 = vmatprep.mubr.f32.mxu0 0.0
    %1133 = vmatmul.mubr.f32.gmra.mrb[0].mxu0 %v1021
    %v1134 = vpop.f32.mrb[0].mxu0
    %v1135 = vadd.f32 0.0, %v1134
    %v1136 = vpop.f32.mrb[0].mxu0
    %1137 = vmatprep.mubr.f32.mxu0 0.0
    %1138 = vmatmul.mubr.f32.gmra.mrb[0].mxu0 %v1023
    %v1139 = vpop.f32.mrb[0].mxu0
    %v1140 = vadd.f32 0.0, %v1139
    %v1141 = vpop.f32.mrb[0].mxu0
    %1142 = vmatprep.mubr.f32.mxu0 0.0
    %1143 = vmatmul.mubr.f32.gmra.mrb[0].mxu0 %v1025
    %v1144 = vpop.f32.mrb[0].mxu0
    %v1145 = vadd.f32 0.0, %v1144
    %v1146 = vpop.f32.mrb[0].mxu0
    %1147 = vdwg.mxu0
    %v1148 = vmul.f32 %v1110, 0.35355338
    %v1149 = vmul.f32 %v1115, 0.35355338
    %v1150 = vmul.f32 %v1120, 0.35355338
    %v1151 = vmul.f32 %v1125, 0.35355338
    %v1152 = vmul.f32 %v1130, 0.35355338
    %v1153 = vmul.f32 %v1135, 0.35355338
    %v1154 = vmul.f32 %v1140, 0.35355338
    %v1155 = vmul.f32 %v1145, 0.35355338
    %v1156 = vadd.f32 %v1148, %v40
    %v1157 = vadd.f32 %v1149, %v41
    %v1158 = vadd.f32 %v1150, %v42
    %v1159 = vadd.f32 %v1151, %v43
    %v1160 = vadd.f32 %v1152, %v44
    %v1161 = vadd.f32 %v1153, %v45
    %v1162 = vadd.f32 %v1154, %v46
    %v1163 = vadd.f32 %v1155, %v47
    %v1164 = vsel %vm338, %v1156, -inf
    %1165 = vmax.xlane.f32.xlu0 %v1164
    %v1166 = vpop.xlane.xlu0 %1165
    %v1167 = vsel %vm338, %v1157, -inf
    %1168 = vmax.xlane.f32.xlu0 %v1167
    %v1169 = vpop.xlane.xlu0 %1168
    %v1170 = vsel %vm338, %v1158, -inf
    %1171 = vmax.xlane.f32.xlu0 %v1170
    %v1172 = vpop.xlane.xlu0 %1171
    %v1173 = vsel %vm338, %v1159, -inf
    %1174 = vmax.xlane.f32.xlu0 %v1173
    %v1175 = vpop.xlane.xlu0 %1174
    %v1176 = vsel %vm338, %v1160, -inf
    %1177 = vmax.xlane.f32.xlu0 %v1176
    %v1178 = vpop.xlane.xlu0 %1177
    %v1179 = vsel %vm338, %v1161, -inf
    %1180 = vmax.xlane.f32.xlu0 %v1179
    %v1181 = vpop.xlane.xlu0 %1180
    %v1182 = vsel %vm338, %v1162, -inf
    %1183 = vmax.xlane.f32.xlu0 %v1182
    %v1184 = vpop.xlane.xlu0 %1183
    %v1185 = vsel %vm338, %v1163, -inf
    %1186 = vmax.xlane.f32.xlu0 %v1185
    %v1187 = vpop.xlane.xlu0 %1186
    %v1188 = vsub.f32 %v1156, %v1166
    %v1189 = vsub.f32 %v1157, %v1169
    %v1190 = vsub.f32 %v1158, %v1172
    %v1191 = vsub.f32 %v1159, %v1175
    %v1192 = vsub.f32 %v1160, %v1178
    %v1193 = vsub.f32 %v1161, %v1181
    %v1194 = vsub.f32 %v1162, %v1184
    %v1195 = vsub.f32 %v1163, %v1187
    %v1196 = vmul.f32 %v1188, 1.442695
    %v1197 = vpow.pop %v1196
    %v1198 = vmul.f32 %v1189, 1.442695
    %v1199 = vpow.pop %v1198
    %v1200 = vmul.f32 %v1190, 1.442695
    %v1201 = vpow.pop %v1200
    %v1202 = vmul.f32 %v1191, 1.442695
    %v1203 = vpow.pop %v1202
    %v1204 = vmul.f32 %v1192, 1.442695
    %v1205 = vpow.pop %v1204
    %v1206 = vmul.f32 %v1193, 1.442695
    %v1207 = vpow.pop %v1206
    %v1208 = vmul.f32 %v1194, 1.442695
    %v1209 = vpow.pop %v1208
    %v1210 = vmul.f32 %v1195, 1.442695
    %v1211 = vpow.pop %v1210
    %v1212 = vsel %vm338, %v1197, 0.0
    %1213 = vadd.xlane.f32.xlu0 %v1212
    %v1214 = vpop.xlane.xlu0 %1213
    %v1215 = vsel %vm338, %v1199, 0.0
    %1216 = vadd.xlane.f32.xlu0 %v1215
    %v1217 = vpop.xlane.xlu0 %1216
    %v1218 = vsel %vm338, %v1201, 0.0
    %1219 = vadd.xlane.f32.xlu0 %v1218
    %v1220 = vpop.xlane.xlu0 %1219
    %v1221 = vsel %vm338, %v1203, 0.0
    %1222 = vadd.xlane.f32.xlu0 %v1221
    %v1223 = vpop.xlane.xlu0 %1222
    %v1224 = vsel %vm338, %v1205, 0.0
    %1225 = vadd.xlane.f32.xlu0 %v1224
    %v1226 = vpop.xlane.xlu0 %1225
    %v1227 = vsel %vm338, %v1207, 0.0
    %1228 = vadd.xlane.f32.xlu0 %v1227
    %v1229 = vpop.xlane.xlu0 %1228
    %v1230 = vsel %vm338, %v1209, 0.0
    %1231 = vadd.xlane.f32.xlu0 %v1230
    %v1232 = vpop.xlane.xlu0 %1231
    %v1233 = vsel %vm338, %v1211, 0.0
    %1234 = vadd.xlane.f32.xlu0 %v1233
    %v1235 = vpop.xlane.xlu0 %1234
    %v1236 = vrcp.pop %v1214
    %v1237 = vrcp.pop %v1217
    %v1238 = vrcp.pop %v1220
    %v1239 = vrcp.pop %v1223
    %v1240 = vrcp.pop %v1226
    %v1241 = vrcp.pop %v1229
    %v1242 = vrcp.pop %v1232
    %v1243 = vrcp.pop %v1235
    %v1244 = vmul.f32 %v1197, %v1236
    %v1245 = vmul.f32 %v1199, %v1237
    %v1246 = vmul.f32 %v1201, %v1238
    %v1247 = vmul.f32 %v1203, %v1239
    %v1248 = vmul.f32 %v1205, %v1240
    %v1249 = vmul.f32 %v1207, %v1241
    %v1250 = vmul.f32 %v1209, %v1242
    %v1251 = vmul.f32 %v1211, %v1243
    %1252 = vrot.lane.b32.xlu0 %v975, 64
    %v1253 = vpop.permute.xlu0 %1252
    %1254 = vrot.lane.b32.xlu0 %v978, 64
    %v1255 = vpop.permute.xlu0 %1254
    %1256 = vrot.lane.b32.xlu0 %v984, 64
    %v1257 = vpop.permute.xlu0 %1256
    %1258 = vrot.lane.b32.xlu0 %v986, 64
    %v1259 = vpop.permute.xlu0 %1258
    %1260 = vrot.lane.b32.xlu0 %v988, 64
    %v1261 = vpop.permute.xlu0 %1260
    %1262 = vrot.lane.b32.xlu0 %v990, 64
    %v1263 = vpop.permute.xlu0 %1262
    %1264 = vrot.lane.b32.xlu0 %v992, 64
    %v1265 = vpop.permute.xlu0 %1264
    %1266 = vrot.lane.b32.xlu0 %v994, 64
    %v1267 = vpop.permute.xlu0 %1266
    %v1277 = vsel %vm338, %v1244, 0
    %v1280 = vsel %vm338, %v1245, 0
    %v1283 = vsel %vm338, %v1246, 0
    %v1286 = vsel %vm338, %v1247, 0
    %v1289 = vsel %vm338, %v1248, 0
    %v1292 = vsel %vm338, %v1249, 0
    %v1295 = vsel %vm338, %v1250, 0
    %v1298 = vsel %vm338, %v1251, 0
    %1300 = vmatprep.subr.mxu0 0.0
    %1301 = vmatpush1.msra.mxu0 %v1253
    %1302 = vmatprep.subr.mxu0 0.0
    %1303 = vmatpush1.msra.mxu0 %v1255
    %1304 = vmatprep.subr.mxu0 0.0
    %1305 = vmatpush1.msra.mxu0 %v1257
    %1306 = vmatprep.subr.mxu0 0.0
    %1307 = vmatpush1.msra.mxu0 %v1259
    %1308 = vmatprep.subr.mxu0 0.0
    %1309 = vmatpush1.msra.mxu0 %v1261
    %1310 = vmatprep.subr.mxu0 0.0
    %1311 = vmatpush1.msra.mxu0 %v1263
    %1312 = vmatprep.subr.mxu0 0.0
    %1313 = vmatpush1.msra.mxu0 %v1265
    %1314 = vmatprep.subr.mxu0 0.0
    %1315 = vmatpush1.msra.mxu0 %v1267
    %1316 = vmatprep.subr.mxu0 0.0
    %1317 = vmatpush1.msra.mxu0 0.0
    %1318 = vmatprep.subr.mxu0 0.0
    %1319 = vmatpush1.msra.mxu0 0.0
    %1320 = vmatprep.subr.mxu0 0.0
    %1321 = vmatpush1.msra.mxu0 0.0
    %1322 = vmatprep.subr.mxu0 0.0
    %1323 = vmatpush1.msra.mxu0 0.0
    %1324 = vmatprep.subr.mxu0 0.0
    %1325 = vmatpush1.msra.mxu0 0.0
    %1326 = vmatprep.subr.mxu0 0.0
    %1327 = vmatpush1.msra.mxu0 0.0
    %1328 = vmatprep.subr.mxu0 0.0
    %1329 = vmatpush1.msra.mxu0 0.0
    %1330 = vmatprep.subr.mxu0 0.0
    %1331 = vmatpush1.msra.mxu0 0.0
    %1332 = vmatprep.subr.mxu0 0.0
    %1333 = vmatpush1.msra.mxu0 0.0
    %1334 = vmatprep.subr.mxu0 0.0
    %1335 = vmatpush1.msra.mxu0 0.0
    %1336 = vmatprep.subr.mxu0 0.0
    %1337 = vmatpush1.msra.mxu0 0.0
    %1338 = vmatprep.subr.mxu0 0.0
    %1339 = vmatpush1.msra.mxu0 0.0
    %1340 = vmatprep.subr.mxu0 0.0
    %1341 = vmatpush1.msra.mxu0 0.0
    %1342 = vmatprep.subr.mxu0 0.0
    %1343 = vmatpush1.msra.mxu0 0.0
    %1344 = vmatprep.subr.mxu0 0.0
    %1345 = vmatpush1.msra.mxu0 0.0
    %1346 = vmatprep.subr.mxu0 0.0
    %1347 = vmatpush1.msra.mxu0 0.0
    %1348 = vmatprep.subr.mxu0 0.0
    %1349 = vmatpush1.msra.mxu0 0.0
    %1350 = vmatprep.subr.mxu0 0.0
    %1351 = vmatpush1.msra.mxu0 0.0
    %1352 = vmatprep.subr.mxu0 0.0
    %1353 = vmatpush1.msra.mxu0 0.0
    %1354 = vmatprep.subr.mxu0 0.0
    %1355 = vmatpush1.msra.mxu0 0.0
    %1356 = vmatprep.subr.mxu0 0.0
    %1357 = vmatpush1.msra.mxu0 0.0
    %1358 = vmatprep.subr.mxu0 0.0
    %1359 = vmatpush1.msra.mxu0 0.0
    %1360 = vmatprep.subr.mxu0 0.0
    %1361 = vmatpush1.msra.mxu0 0.0
    %1362 = vmatprep.subr.mxu0 0.0
    %1363 = vmatpush1.msra.mxu0 0.0
    %1364 = vmatprep.mubr.f32.mxu0 0.0
    %1365 = vmatmul.mubr.f32.gmra.mrb[0].mxu0 %v1277
    %v1366 = vpop.f32.mrb[0].mxu0
    %v1367 = vadd.f32 0.0, %v1366
    %v1368 = vpop.f32.mrb[0].mxu0
    %1369 = vmatprep.mubr.f32.mxu0 0.0
    %1370 = vmatmul.mubr.f32.gmra.mrb[0].mxu0 %v1280
    %v1371 = vpop.f32.mrb[0].mxu0
    %v1372 = vadd.f32 0.0, %v1371
    %v1373 = vpop.f32.mrb[0].mxu0
    %1374 = vmatprep.mubr.f32.mxu0 0.0
    %1375 = vmatmul.mubr.f32.gmra.mrb[0].mxu0 %v1283
    %v1376 = vpop.f32.mrb[0].mxu0
    %v1377 = vadd.f32 0.0, %v1376
    %v1378 = vpop.f32.mrb[0].mxu0
    %1379 = vmatprep.mubr.f32.mxu0 0.0
    %1380 = vmatmul.mubr.f32.gmra.mrb[0].mxu0 %v1286
    %v1381 = vpop.f32.mrb[0].mxu0
    %v1382 = vadd.f32 0.0, %v1381
    %v1383 = vpop.f32.mrb[0].mxu0
    %1384 = vmatprep.mubr.f32.mxu0 0.0
    %1385 = vmatmul.mubr.f32.gmra.mrb[0].mxu0 %v1289
    %v1386 = vpop.f32.mrb[0].mxu0
    %v1387 = vadd.f32 0.0, %v1386
    %v1388 = vpop.f32.mrb[0].mxu0
    %1389 = vmatprep.mubr.f32.mxu0 0.0
    %1390 = vmatmul.mubr.f32.gmra.mrb[0].mxu0 %v1292
    %v1391 = vpop.f32.mrb[0].mxu0
    %v1392 = vadd.f32 0.0, %v1391
    %v1393 = vpop.f32.mrb[0].mxu0
    %1394 = vmatprep.mubr.f32.mxu0 0.0
    %1395 = vmatmul.mubr.f32.gmra.mrb[0].mxu0 %v1295
    %v1396 = vpop.f32.mrb[0].mxu0
    %v1397 = vadd.f32 0.0, %v1396
    %v1398 = vpop.f32.mrb[0].mxu0
    %1399 = vmatprep.mubr.f32.mxu0 0.0
    %1400 = vmatmul.mubr.f32.gmra.mrb[0].mxu0 %v1298
    %v1401 = vpop.f32.mrb[0].mxu0
    %v1402 = vadd.f32 0.0, %v1401
    %v1403 = vpop.f32.mrb[0].mxu0
    %1404 = vdwg.mxu0
    %1407 = vrot.lane.b32.xlu0 %v1377, 8
    %v1408 = vpop.permute.xlu0 %1407
    %1409 = vrot.lane.b32.xlu0 %v1382, 8
    %v1410 = vpop.permute.xlu0 %1409
    %1415 = vrot.lane.b32.xlu0 %v1387, 16
    %v1416 = vpop.permute.xlu0 %1415
    %1417 = vrot.lane.b32.xlu0 %v1392, 16
    %v1418 = vpop.permute.xlu0 %1417
    %1423 = vrot.lane.b32.xlu0 %v1397, 24
    %v1424 = vpop.permute.xlu0 %1423
    %1425 = vrot.lane.b32.xlu0 %v1402, 24
    %v1426 = vpop.permute.xlu0 %1425
    %v1429 = vsel %vm184, %v1367, %v1408
    %v1430 = vsel %vm184, %v1372, %v1410
    %v1431 = vsel %vm606, %v1429, %v1416
    %v1432 = vsel %vm606, %v1430, %v1418
    %v1433 = vsel %vm609, %v1431, %v1424
    %v1434 = vsel %vm609, %v1432, %v1426
    %v1435 = vpack.c.bf16 %v1434, %v1433
    %s1436 = scalar_lea.vmem %s4, 16
    %v1437 = vld [vmem:[%s1436] sm:$0xf]
    %v1438 = vld [vmem:[%s1436 + $0x4] sm:$0xf]
    %v1439 = vld [vmem:[%s1436 + $0x8] sm:$0xf]
    %v1440 = vld [vmem:[%s1436 + $0xc] sm:$0xf]
    %v1441 = vlaneseq
    %v1442 = vshrl.u32 %v1441, 7
    %v1443 = vsub.s32 5, %v1442
    %v1444 = vrot.slane %v876, %v1443
    %v1449 = vunpack.c.l.b16 %v1437
    %v1450 = vunpack.c.l.b16 %v1438
    %v1451 = vunpack.c.l.b16 %v1439
    %v1452 = vunpack.c.l.b16 %v1440
    %v1453 = vpack.c.b16 %v1450, %v1449
    %v1454 = vpack.c.b16 %v1452, %v1451
    %v1458 = vsel %vm49, %v1435, 0
    %1460 = vmatprep.subr.bf16.mxu0 0
    %1461 = vmatpush1.bf16.msra.mxu0 %v1453
    %1462 = vmatprep.subr.bf16.mxu0 0
    %1463 = vmatpush1.bf16.msra.mxu0 %v1454
    %1464 = vmatprep.subr.bf16.mxu0 0
    %1465 = vmatpush1.bf16.msra.mxu0 0
    %1466 = vmatprep.subr.bf16.mxu0 0
    %1467 = vmatpush1.bf16.msra.mxu0 0
    %1468 = vmatprep.subr.bf16.mxu0 0
    %1469 = vmatpush1.bf16.msra.mxu0 0
    %1470 = vmatprep.subr.bf16.mxu0 0
    %1471 = vmatpush1.bf16.msra.mxu0 0
    %1472 = vmatprep.subr.bf16.mxu0 0
    %1473 = vmatpush1.bf16.msra.mxu0 0
    %1474 = vmatprep.subr.bf16.mxu0 0
    %1475 = vmatpush1.bf16.msra.mxu0 0
    %1476 = vmatprep.subr.bf16.mxu0 0
    %1477 = vmatpush1.bf16.msra.mxu0 0
    %1478 = vmatprep.subr.bf16.mxu0 0
    %1479 = vmatpush1.bf16.msra.mxu0 0
    %1480 = vmatprep.subr.bf16.mxu0 0
    %1481 = vmatpush1.bf16.msra.mxu0 0
    %1482 = vmatprep.subr.bf16.mxu0 0
    %1483 = vmatpush1.bf16.msra.mxu0 0
    %1484 = vmatprep.subr.bf16.mxu0 0
    %1485 = vmatpush1.bf16.msra.mxu0 0
    %1486 = vmatprep.subr.bf16.mxu0 0
    %1487 = vmatpush1.bf16.msra.mxu0 0
    %1488 = vmatprep.subr.bf16.mxu0 0
    %1489 = vmatpush1.bf16.msra.mxu0 0
    %1490 = vmatprep.subr.bf16.mxu0 0
    %1491 = vmatpush1.bf16.msra.mxu0 0
    %1492 = vmatprep.mubr.bf16.mxu0 0
    %1493 = vmatmul.mubr.bf16.gmra.mrb[0].mxu0 %v1458
    %v1494 = vpop.f32.mrb[0].mxu0
    %v1495 = vadd.f32 %v1444, %v1494
    %v1496 = vpop.f32.mrb[0].mxu0
    %v1497 = vpop.f32.mrb[0].mxu0
    %v1498 = vadd.f32 %v1444, %v1497
    %v1499 = vpop.f32.mrb[0].mxu0
    %1500 = vdwg.mxu0
    %v1501 = vadd.f32 %v873, %v1495
    %v1502 = vadd.f32 %v874, %v1498
    %v1503 = vsel %vm49, %v1501, 0.0
    %1504 = vadd.xlane.f32.xlu0 %v1503
    %v1505 = vpop.xlane.xlu0 %1504
    %v1506 = vsel %vm49, %v1502, 0.0
    %1507 = vadd.xlane.f32.xlu0 %v1506
    %v1508 = vpop.xlane.xlu0 %1507
    %v1509 = vmul.f32 %v1505, %v56
    %v1510 = vmul.f32 %v1508, %v56
    %v1511 = vsub.f32 %v1501, %v1509
    %v1512 = vsub.f32 %v1502, %v1510
    %v1513 = vmul.f32 %v1511, %v1511
    %v1514 = vmul.f32 %v1512, %v1512
    %v1515 = vsel %vm49, %v1513, 0.0
    %1516 = vadd.xlane.f32.xlu0 %v1515
    %v1517 = vpop.xlane.xlu0 %1516
    %v1518 = vsel %vm49, %v1514, 0.0
    %1519 = vadd.xlane.f32.xlu0 %v1518
    %v1520 = vpop.xlane.xlu0 %1519
    %v1521 = vmul.f32 %v1517, %v56
    %v1522 = vmul.f32 %v1520, %v56
    %v1523 = vadd.f32 %v1521, 1e-05
    %v1524 = vadd.f32 %v1522, 1e-05
    %v1525 = vrsqrt.pop %v1523
    %v1526 = vrsqrt.pop %v1524
    %v1527 = vmul.f32 %v1511, %v1525
    %v1528 = vmul.f32 %v1512, %v1526
    %v1529 = vlaneseq
    %v1530 = vshrl.u32 %v1529, 7
    %v1531 = vsub.s32 2, %v1530
    %v1532 = vrot.slane %v876, %v1531
    %v1533 = vmul.f32 %v1527, %v1532
    %v1534 = vmul.f32 %v1528, %v1532
    %v1535 = vlaneseq
    %v1536 = vshrl.u32 %v1535, 7
    %v1537 = vsub.s32 3, %v1536
    %v1538 = vrot.slane %v876, %v1537
    %v1539 = vadd.f32 %v1533, %v1538
    %v1540 = vadd.f32 %v1534, %v1538
    %v1541 = vpack.c.bf16 %v1540, %v1539
    %s1542 = scalar_lea.vmem %s5, 16
    %v1543 = vld [vmem:[%s1542] sm:$0xf]
    %v1544 = vld [vmem:[%s1542 + $0x4] sm:$0xf]
    %v1545 = vld [vmem:[%s1542 + $0x8] sm:$0xf]
    %v1546 = vld [vmem:[%s1542 + $0xc] sm:$0xf]
    %v1547 = vlaneseq
    %v1548 = vshrl.u32 %v1547, 7
    %v1549 = vsub.s32 6, %v1548
    %v1550 = vrot.slane %v876, %v1549
    %v1555 = vunpack.c.l.b16 %v1543
    %v1556 = vunpack.c.l.b16 %v1544
    %v1557 = vunpack.c.l.b16 %v1545
    %v1558 = vunpack.c.l.b16 %v1546
    %v1559 = vpack.c.b16 %v1556, %v1555
    %v1560 = vpack.c.b16 %v1558, %v1557
    %v1564 = vsel %vm49, %v1541, 0
    %1566 = vmatprep.subr.bf16.mxu0 0
    %1567 = vmatpush1.bf16.msra.mxu0 %v1559
    %1568 = vmatprep.subr.bf16.mxu0 0
    %1569 = vmatpush1.bf16.msra.mxu0 %v1560
    %1570 = vmatprep.subr.bf16.mxu0 0
    %1571 = vmatpush1.bf16.msra.mxu0 0
    %1572 = vmatprep.subr.bf16.mxu0 0
    %1573 = vmatpush1.bf16.msra.mxu0 0
    %1574 = vmatprep.subr.bf16.mxu0 0
    %1575 = vmatpush1.bf16.msra.mxu0 0
    %1576 = vmatprep.subr.bf16.mxu0 0
    %1577 = vmatpush1.bf16.msra.mxu0 0
    %1578 = vmatprep.subr.bf16.mxu0 0
    %1579 = vmatpush1.bf16.msra.mxu0 0
    %1580 = vmatprep.subr.bf16.mxu0 0
    %1581 = vmatpush1.bf16.msra.mxu0 0
    %1582 = vmatprep.subr.bf16.mxu0 0
    %1583 = vmatpush1.bf16.msra.mxu0 0
    %1584 = vmatprep.subr.bf16.mxu0 0
    %1585 = vmatpush1.bf16.msra.mxu0 0
    %1586 = vmatprep.subr.bf16.mxu0 0
    %1587 = vmatpush1.bf16.msra.mxu0 0
    %1588 = vmatprep.subr.bf16.mxu0 0
    %1589 = vmatpush1.bf16.msra.mxu0 0
    %1590 = vmatprep.subr.bf16.mxu0 0
    %1591 = vmatpush1.bf16.msra.mxu0 0
    %1592 = vmatprep.subr.bf16.mxu0 0
    %1593 = vmatpush1.bf16.msra.mxu0 0
    %1594 = vmatprep.subr.bf16.mxu0 0
    %1595 = vmatpush1.bf16.msra.mxu0 0
    %1596 = vmatprep.subr.bf16.mxu0 0
    %1597 = vmatpush1.bf16.msra.mxu0 0
    %1598 = vmatprep.mubr.bf16.mxu0 0
    %1599 = vmatmul.mubr.bf16.gmra.mrb[0].mxu0 %v1564
    %v1600 = vpop.f32.mrb[0].mxu0
    %v1601 = vadd.f32 %v1550, %v1600
    %v1602 = vpop.f32.mrb[0].mxu0
    %v1603 = vpop.f32.mrb[0].mxu0
    %v1604 = vadd.f32 %v1550, %v1603
    %v1605 = vpop.f32.mrb[0].mxu0
    %1606 = vdwg.mxu0
    %v1607 = vmul.f32 %v1601, 0.5
    %v1608 = vmul.f32 %v1604, 0.5
    %v1609 = vmul.f32 %v1601, 0.70710677
    %v1610 = vmul.f32 %v1604, 0.70710677
    %v1611 = verf.f32.pop %v1609
    %v1612 = verf.f32.pop %v1610
    %v1613 = vadd.f32 %v1611, 1.0
    %v1614 = vadd.f32 %v1612, 1.0
    %v1615 = vmul.f32 %v1607, %v1613
    %v1616 = vmul.f32 %v1608, %v1614
    %v1617 = vpack.c.bf16 %v1616, %v1615
    %s1618 = scalar_lea.vmem %s6, 32
    %v1619 = vld [vmem:[%s1618] sm:$0xf]
    %v1620 = vld [vmem:[%s1618 + $0x4] sm:$0xf]
    %v1621 = vld [vmem:[%s1618 + $0x8] sm:$0xf]
    %v1622 = vld [vmem:[%s1618 + $0xc] sm:$0xf]
    %v1623 = vld [vmem:[%s1618 + $0x10] sm:$0xf]
    %v1624 = vld [vmem:[%s1618 + $0x14] sm:$0xf]
    %v1625 = vld [vmem:[%s1618 + $0x18] sm:$0xf]
    %v1626 = vld [vmem:[%s1618 + $0x1c] sm:$0xf]
    %v1627 = vlaneseq
    %v1628 = vshrl.u32 %v1627, 7
    %v1629 = vsub.s32 7, %v1628
    %v1630 = vrot.slane %v876, %v1629
    %v1639 = vunpack.c.l.b16 %v1619
    %v1640 = vunpack.c.l.b16 %v1620
    %v1641 = vunpack.c.l.b16 %v1621
    %v1642 = vunpack.c.l.b16 %v1622
    %v1643 = vunpack.c.l.b16 %v1623
    %v1644 = vunpack.c.l.b16 %v1624
    %v1645 = vunpack.c.l.b16 %v1625
    %v1646 = vunpack.c.l.b16 %v1626
    %v1647 = vpack.c.b16 %v1640, %v1639
    %v1648 = vpack.c.b16 %v1642, %v1641
    %v1649 = vpack.c.b16 %v1644, %v1643
    %v1650 = vpack.c.b16 %v1646, %v1645
    %v1656 = vsel %vm338, %v1617, 0
    %1658 = vmatprep.subr.bf16.mxu0 0
    %1659 = vmatpush1.bf16.msra.mxu0 %v1647
    %1660 = vmatprep.subr.bf16.mxu0 0
    %1661 = vmatpush1.bf16.msra.mxu0 %v1648
    %1662 = vmatprep.subr.bf16.mxu0 0
    %1663 = vmatpush1.bf16.msra.mxu0 %v1649
    %1664 = vmatprep.subr.bf16.mxu0 0
    %1665 = vmatpush1.bf16.msra.mxu0 %v1650
    %1666 = vmatprep.subr.bf16.mxu0 0
    %1667 = vmatpush1.bf16.msra.mxu0 0
    %1668 = vmatprep.subr.bf16.mxu0 0
    %1669 = vmatpush1.bf16.msra.mxu0 0
    %1670 = vmatprep.subr.bf16.mxu0 0
    %1671 = vmatpush1.bf16.msra.mxu0 0
    %1672 = vmatprep.subr.bf16.mxu0 0
    %1673 = vmatpush1.bf16.msra.mxu0 0
    %1674 = vmatprep.subr.bf16.mxu0 0
    %1675 = vmatpush1.bf16.msra.mxu0 0
    %1676 = vmatprep.subr.bf16.mxu0 0
    %1677 = vmatpush1.bf16.msra.mxu0 0
    %1678 = vmatprep.subr.bf16.mxu0 0
    %1679 = vmatpush1.bf16.msra.mxu0 0
    %1680 = vmatprep.subr.bf16.mxu0 0
    %1681 = vmatpush1.bf16.msra.mxu0 0
    %1682 = vmatprep.subr.bf16.mxu0 0
    %1683 = vmatpush1.bf16.msra.mxu0 0
    %1684 = vmatprep.subr.bf16.mxu0 0
    %1685 = vmatpush1.bf16.msra.mxu0 0
    %1686 = vmatprep.subr.bf16.mxu0 0
    %1687 = vmatpush1.bf16.msra.mxu0 0
    %1688 = vmatprep.subr.bf16.mxu0 0
    %1689 = vmatpush1.bf16.msra.mxu0 0
    %1690 = vmatprep.mubr.bf16.mxu0 0
    %1691 = vmatmul.mubr.bf16.gmra.mrb[0].mxu0 %v1656
    %v1692 = vpop.f32.mrb[0].mxu0
    %v1693 = vadd.f32 %v1630, %v1692
    %v1694 = vpop.f32.mrb[0].mxu0
    %v1695 = vpop.f32.mrb[0].mxu0
    %v1696 = vadd.f32 %v1630, %v1695
    %v1697 = vpop.f32.mrb[0].mxu0
    %1698 = vdwg.mxu0
    %v1699 = vadd.f32 %v1501, %v1693
    %v1700 = vadd.f32 %v1502, %v1696
    %v1701 = vld [vmem:[%s8] sm:$0x3]
    %v1702 = vsel %vm49, %v1699, 0.0
    %1703 = vadd.xlane.f32.xlu0 %v1702
    %v1704 = vpop.xlane.xlu0 %1703
    %v1705 = vsel %vm49, %v1700, 0.0
    %1706 = vadd.xlane.f32.xlu0 %v1705
    %v1707 = vpop.xlane.xlu0 %1706
    %v1708 = vmul.f32 %v1704, %v56
    %v1709 = vmul.f32 %v1707, %v56
    %v1710 = vsub.f32 %v1699, %v1708
    %v1711 = vsub.f32 %v1700, %v1709
    %v1712 = vmul.f32 %v1710, %v1710
    %v1713 = vmul.f32 %v1711, %v1711
    %v1714 = vsel %vm49, %v1712, 0.0
    %1715 = vadd.xlane.f32.xlu0 %v1714
    %v1716 = vpop.xlane.xlu0 %1715
    %v1717 = vsel %vm49, %v1713, 0.0
    %1718 = vadd.xlane.f32.xlu0 %v1717
    %v1719 = vpop.xlane.xlu0 %1718
    %v1720 = vmul.f32 %v1716, %v56
    %v1721 = vmul.f32 %v1719, %v56
    %v1722 = vadd.f32 %v1720, 1e-05
    %v1723 = vadd.f32 %v1721, 1e-05
    %v1724 = vrsqrt.pop %v1722
    %v1725 = vrsqrt.pop %v1723
    %v1726 = vmul.f32 %v1710, %v1724
    %v1727 = vmul.f32 %v1711, %v1725
    %v1728 = vlaneseq
    %v1729 = vshrl.u32 %v1728, 7
    %v1730 = vsub.s32 0, %v1729
    %v1731 = vrot.slane %v1701, %v1730
    %v1732 = vmul.f32 %v1726, %v1731
    %v1733 = vmul.f32 %v1727, %v1731
    %v1734 = vlaneseq
    %v1735 = vshrl.u32 %v1734, 7
    %v1736 = vsub.s32 1, %v1735
    %v1737 = vrot.slane %v1701, %v1736
    %v1738 = vadd.f32 %v1732, %v1737
    %v1739 = vadd.f32 %v1733, %v1737
    %1740 = vst.msk [vmem:[#allocation2] sm:$0xff] %vm49, %v1738
    %1741 = vst.msk [vmem:[#allocation2 + $0x8] sm:$0xff] %vm49, %v1739
    // Predicated region
    $region38: #{fancy_encoder_forward.1} parent=1 // pred_check
      _
    $region39: #{fancy_encoder_forward.1} parent=1 // pred_check_branch
      %1743 = sbr.rel (0) target = $region41
    $region40: #{fancy_encoder_forward.1} parent=1 // pred_region
      %s1745 = ssub.s32 256, 256
      %1746 = vsyncadd [#allocation3], %s1745
      %s1747 = sshll.u32 [#allocation2], 4
      %s1748 = int_to_ptr.vmem [resolvable:$true] %s1747
      %1753 = dma.vmem_to_hbm [thread:$0]  %s1748, 256, %s9, [#allocation3], 128, 128, 8
    $region41: #{fancy_encoder_forward.1} parent=1 // pred_fallthru
      _
    // Predicated region
    $region42: #{fancy_encoder_forward.1} parent=1 // pred_check
      _
    $region43: #{fancy_encoder_forward.1} parent=1 // pred_check_branch
      %1755 = sbr.rel (0) target = $region45
    $region44: #{fancy_encoder_forward.1} parent=1 // pred_region
      %1756 = dma.done [#allocation3], 256
    $region45: #{fancy_encoder_forward.1} parent=1 // pred_fallthru
      _
    %1757 = vsyncpa [#allocation3], 1

</llo_original>
